<compile_context>
chip_gen: v5e
topology: v5e:2x2
jax: 0.10.0
libtpu: 0.0.40
codegen_flags: <defaults>
</compile_context>

<pallas_src>
import functools

import jax
import jax.numpy as jnp
from jax.experimental import pallas as pl
from jax.experimental.pallas import tpu as pltpu


def _rotary_kernel(pos_ref, inv_ref, cos_ref, sin_ref, *, attention_scaling):
    """One (batch, seq-tile) grid step.

    pos_ref : (1, TS)   int32   position ids for this tile (TS on the lane axis)
    inv_ref : (half, 1) float32 inverse frequencies
    cos_ref : (TS, dim) out dtype (dim = 2*half)
    sin_ref : (TS, dim) out dtype
    """
    pos = pos_ref[...].astype(jnp.float32)            # (1, TS)  in-kernel cast
    inv = inv_ref[...]                                 # (half, 1)

    # Outer product on the VPU with the long TS axis on lanes -> full-width
    # vregs for the EUP cos/sin below.
    freqs_t = inv * pos                                # (half, TS)

    cos_t = jnp.cos(freqs_t)
    sin_t = jnp.sin(freqs_t)
    if attention_scaling != 1.0:                       # compile-time guard
        cos_t = cos_t * attention_scaling
        sin_t = sin_t * attention_scaling

    # XLU transpose back to (TS, half) just before the store.
    cos_h = jnp.transpose(cos_t, (1, 0)).astype(cos_ref.dtype)   # (TS, half)
    sin_h = jnp.transpose(sin_t, (1, 0)).astype(sin_ref.dtype)   # (TS, half)

    # emb = concat((freqs, freqs), -1): single lane-dense store per output.
    cos_ref[...] = jnp.concatenate([cos_h, cos_h], axis=-1)      # (TS, dim)
    sin_ref[...] = jnp.concatenate([sin_h, sin_h], axis=-1)      # (TS, dim)


def _pick_seq_tile(S):
    for ts in (2048, 1024, 512, 256, 128):
        if S % ts == 0:
            return ts
    return S  # short / ragged sequence: one whole-sequence tile, no masking needed


def modern_bert_rotary_embedding(x, position_ids, inv_freq, attention_scaling=1.0):
    """Returns (cos, sin), each of shape (B, S, dim) and dtype x.dtype."""
    B, S = position_ids.shape
    half = inv_freq.shape[0]
    dim = 2 * half
    TS = _pick_seq_tile(S)

    pos3 = position_ids.reshape(B, 1, S)                      # keep raw int32
    inv2 = inv_freq.astype(jnp.float32).reshape(half, 1)

    kernel = functools.partial(_rotary_kernel,
                               attention_scaling=float(attention_scaling))

    out_dtype = x.dtype
    itemsize = jnp.dtype(out_dtype).itemsize
    cost = pl.CostEstimate(
        flops=3 * B * S * half,
        transcendentals=2 * B * S * half,
        bytes_accessed=2 * B * S * dim * itemsize
        + B * S * jnp.dtype(position_ids.dtype).itemsize
        + half * 4,
    )

    cos, sin = pl.pallas_call(
        kernel,
        out_shape=(
            jax.ShapeDtypeStruct((B, S, dim), out_dtype),
            jax.ShapeDtypeStruct((B, S, dim), out_dtype),
        ),
        grid=(B, S // TS),
        in_specs=[
            # position ids: (B, 1, S) -> kernel sees a (1, TS) lane-dense tile
            pl.BlockSpec((pl.Squeezed(), 1, TS), lambda b, s: (b, 0, s)),
            # inv_freq: whole (half, 1) array, resident every step
            pl.BlockSpec((half, 1), lambda b, s: (0, 0)),
        ],
        out_specs=(
            pl.BlockSpec((pl.Squeezed(), TS, dim), lambda b, s: (b, s, 0)),
            pl.BlockSpec((pl.Squeezed(), TS, dim), lambda b, s: (b, s, 0)),
        ),
        compiler_params=pltpu.CompilerParams(
            dimension_semantics=("parallel", "parallel")),
        cost_estimate=cost,
    )(pos3, inv2)
    return cos, sin


def _reference(x, position_ids, inv_freq, attention_scaling=1.0):
    # Pure-JAX reference mirroring the PyTorch forward exactly.
    inv_freq_expanded = inv_freq[None, :, None].astype(jnp.float32)          # (1, half, 1)
    inv_freq_expanded = jnp.broadcast_to(
        inv_freq_expanded, (position_ids.shape[0], inv_freq.shape[0], 1))    # (B, half, 1)
    position_ids_expanded = position_ids[:, None, :].astype(jnp.float32)     # (B, 1, S)
    freqs = jnp.matmul(inv_freq_expanded, position_ids_expanded)             # (B, half, S)
    freqs = jnp.transpose(freqs, (0, 2, 1))                                  # (B, S, half)
    emb = jnp.concatenate([freqs, freqs], axis=-1)                           # (B, S, dim)
    cos = jnp.cos(emb) * attention_scaling
    sin = jnp.sin(emb) * attention_scaling
    return cos.astype(x.dtype), sin.astype(x.dtype)


if __name__ == "__main__":
    # Deterministic parameter setup (rope_type='default').
    dim = 32                 # rotary head dim
    base = 10000.0
    attention_scaling = 1.0  # default rope init returns 1.0
    inv_freq = 1.0 / (base ** (jnp.arange(0, dim, 2, dtype=jnp.float32) / dim))  # (dim/2,)

    # Small example inputs (S chosen so the grid actually tiles: grid=(2, 2)).
    B, S, hidden = 2, 256, 32
    key = jax.random.PRNGKey(0)
    kx, _ = jax.random.split(key)
    x = jax.random.normal(kx, (B, S, hidden), dtype=jnp.float32)  # only dtype is used
    position_ids = jnp.broadcast_to(jnp.arange(S, dtype=jnp.int32)[None, :], (B, S))

    cos, sin = modern_bert_rotary_embedding(x, position_ids, inv_freq, attention_scaling)
    cos = jax.block_until_ready(cos)
    sin = jax.block_until_ready(sin)

    cos_ref, sin_ref = _reference(x, position_ids, inv_freq, attention_scaling)
    assert cos.shape == (B, S, dim) and sin.shape == (B, S, dim)
    assert cos.dtype == x.dtype and sin.dtype == x.dtype
    assert jnp.allclose(cos, cos_ref, atol=1e-4, rtol=1e-4)
    assert jnp.allclose(sin, sin_ref, atol=1e-4, rtol=1e-4)

    print("KERNEL_OK")
</pallas_src>

<mosaic_0001>
module attributes {stable_mosaic.version = 11 : i64} {
  func.func @_rotary_kernel(%arg0: i32, %arg1: i32, %arg2: memref<1x1x256xi32, #tpu.memory_space<vmem>>, %arg3: memref<16x1xf32, #tpu.memory_space<vmem>>, %arg4: memref<1x256x32xf32, #tpu.memory_space<vmem>>, %arg5: memref<1x256x32xf32, #tpu.memory_space<vmem>>) attributes {dimension_semantics = [#tpu.dimension_semantics<parallel>, #tpu.dimension_semantics<parallel>], iteration_bounds = array<i64: 2, 1>, scalar_prefetch = 0 : i64, scratch_operands = 0 : i64, tpu.core_type = #tpu.core_type<tc>, window_params = [{transform_indices = @transform_0, window_bounds = array<i64: 1, 1, 256>}, {pipeline_mode = #tpu.pipeline_mode<synchronous>, transform_indices = @transform_1, window_bounds = array<i64: 16, 1>}, {transform_indices = @transform_2, window_bounds = array<i64: 1, 256, 32>}, {transform_indices = @transform_3, window_bounds = array<i64: 1, 256, 32>}]} {
    %c0 = arith.constant 0 : index
    %c0_0 = arith.constant 0 : index
    %c0_1 = arith.constant 0 : index
    %0 = vector.load %arg2[%c0, %c0_0, %c0_1] : memref<1x1x256xi32, #tpu.memory_space<vmem>>, vector<1x1x256xi32>
    %1 = vector.shape_cast %0 : vector<1x1x256xi32> to vector<1x256xi32>
    %2 = arith.sitofp %1 : vector<1x256xi32> to vector<1x256xf32>
    %c0_2 = arith.constant 0 : index
    %c0_3 = arith.constant 0 : index
    %3 = vector.load %arg3[%c0_2, %c0_3] : memref<16x1xf32, #tpu.memory_space<vmem>>, vector<16x1xf32>
    %4 = vector.broadcast %3 : vector<16x1xf32> to vector<16x256xf32>
    %5 = vector.broadcast %2 : vector<1x256xf32> to vector<16x256xf32>
    %6 = arith.mulf %4, %5 : vector<16x256xf32>
    %7 = math.cos %6 : vector<16x256xf32>
    %8 = math.sin %6 : vector<16x256xf32>
    %9 = tpu.transpose %7, [1, 0] : vector<16x256xf32> -> vector<256x16xf32>
    %10 = tpu.transpose %8, [1, 0] : vector<16x256xf32> -> vector<256x16xf32>
    %11 = tpu.concatenate %9, %9 in 1 : vector<256x16xf32>, vector<256x16xf32> -> vector<256x32xf32>
    %c0_4 = arith.constant 0 : index
    %c0_5 = arith.constant 0 : index
    %c0_6 = arith.constant 0 : index
    %12 = vector.load %arg4[%c0_4, %c0_5, %c0_6] : memref<1x256x32xf32, #tpu.memory_space<vmem>>, vector<1x256x32xf32>
    %13 = vector.shape_cast %12 : vector<1x256x32xf32> to vector<256x32xf32>
    %14 = vector.shape_cast %11 : vector<256x32xf32> to vector<1x256x32xf32>
    tpu.vector_store %arg4[%c0_4, %c0_5, %c0_6], %14 {strides = array<i32>} : memref<1x256x32xf32, #tpu.memory_space<vmem>>, vector<1x256x32xf32>,
    %15 = tpu.concatenate %10, %10 in 1 : vector<256x16xf32>, vector<256x16xf32> -> vector<256x32xf32>
    %c0_7 = arith.constant 0 : index
    %c0_8 = arith.constant 0 : index
    %c0_9 = arith.constant 0 : index
    %16 = vector.load %arg5[%c0_7, %c0_8, %c0_9] : memref<1x256x32xf32, #tpu.memory_space<vmem>>, vector<1x256x32xf32>
    %17 = vector.shape_cast %16 : vector<1x256x32xf32> to vector<256x32xf32>
    %18 = vector.shape_cast %15 : vector<256x32xf32> to vector<1x256x32xf32>
    tpu.vector_store %arg5[%c0_7, %c0_8, %c0_9], %18 {strides = array<i32>} : memref<1x256x32xf32, #tpu.memory_space<vmem>>, vector<1x256x32xf32>,
    return
  }
  func.func @transform_0(%arg0: i32, %arg1: i32) -> (i32, i32, i32) {
    %c0_i32 = arith.constant 0 : i32
    %c0_i32_0 = arith.constant 0 : i32
    return %arg0, %c0_i32, %arg1 : i32, i32, i32
  }
  func.func @transform_1(%arg0: i32, %arg1: i32) -> (i32, i32) {
    %c0_i32 = arith.constant 0 : i32
    %c0_i32_0 = arith.constant 0 : i32
    %c0_i32_1 = arith.constant 0 : i32
    return %c0_i32, %c0_i32_0 : i32, i32
  }
  func.func @transform_2(%arg0: i32, %arg1: i32) -> (i32, i32, i32) {
    %c0_i32 = arith.constant 0 : i32
    %c0_i32_0 = arith.constant 0 : i32
    return %arg0, %arg1, %c0_i32 : i32, i32, i32
  }
  func.func @transform_3(%arg0: i32, %arg1: i32) -> (i32, i32, i32) {
    %c0_i32 = arith.constant 0 : i32
    %c0_i32_0 = arith.constant 0 : i32
    return %arg0, %arg1, %c0_i32 : i32, i32, i32
  }
}

</mosaic_0001>

<llo_original>
// kernel: tpu_custom_call.1
$region0: #{tpu_custom_call.1}
  #allocation0 [shape = 'u32[]', space=smem, size = 0x4, offset = 0x4, fixed_abs, tag = 'smem constant byte address 0x4 - core index']
  #allocation1 [shape = 'u32[72,128]{1,0:T(1,128)}', space=vmem, size = 0x9000, scoped, tag = 'internal scratch']
  %s0 = inlined_call_operand.vmem [shape: s32[2,1,256], index: 0, kind: input, shape index: {}]
  %s1 = inlined_call_operand.vmem [shape: f32[16,1], index: 1, kind: input, shape index: {}]
  %s2 = inlined_call_operand.vmem [shape: f32[2,256,32], index: 2, kind: output, shape index: {0}]
  %s3 = inlined_call_operand.vmem [shape: f32[2,256,32], index: 3, kind: output, shape index: {1}]
  %4 = xla_tuple %s2, %s3
  %s5 = sld [smem:[#allocation0]]
  $region49: #{tpu_custom_call.1} parent=0
    _
  %s7 = ssub.s32 1, %s5
  %s8 = scalar_select 0, %s7, %s5
  loop: start=0, step=1, limit=4
  $region2: #{tpu_custom_call.1} parent=0 // loop_pre_header
    _
  $region3: #{tpu_custom_call.1} parent=0 // loop_header
    %s10 = sphi 0, %s14
    %p11 = scmp.ge.s32.totalorder %s10, 4
    %s17 = sphi 0, %s29
    %s18 = sphi 0, %s25
    %s19 = sphi 0, %s17
    %s20 = sphi 0, %s18
    %s21 = sphi 0, %s19
    %s22 = sphi 0, %s20
    %s34 = sphi 0, %s36
    %s37 = sphi 0, %s34
    %s38 = sphi 0, %s37
    %s54 = sphi 0, %s38
    %s58 = sphi 0, %s58
    %s60 = sphi 0, %s58
    %s61 = sphi 0, %s60
    %s75 = sphi 0, %s61
    %s83 = sphi 0, %s85
    %s86 = sphi 0, %s83
    %s87 = sphi 0, %s86
    %s103 = sphi 0, %s87
    %s111 = sphi 0, %s113
    %s114 = sphi 0, %s111
    %s115 = sphi 0, %s114
    %s131 = sphi 0, %s115
  $region4: #{tpu_custom_call.1} parent=0 // loop_header_branch
    %13 = sbr.rel (%p11) target = $region8
  $region5: #{tpu_custom_call.1} parent=0 // loop_body
    %s15 = ssub.s32 %s10, 1
    %s16 = ssub.s32 %s10, 2
    %s23 = sadd.s32 1, %s18
    %p24 = scmp.ge.s32.totalorder %s23, 1
    %s25 = scalar_select %p24, 0, %s23
    %s26 = sadd.s32 1, %s17
    %s27 = scalar_select %p24, %s26, %s17
    %p28 = scmp.ge.s32.totalorder %s27, 2
    %s29 = scalar_select %p28, 0, %s27
    %s30 = ssub.s32 %s17, %s29
    %s31 = ssub.s32 %s18, %s25
    %s32 = sor.u32 %s30, %s31
    %p33 = scmp.eq.s32.totalorder %s32, 0
    %s35 = sadd.s32 %s34, 1
    %s36 = scalar_select %p33, %s34, %s35
    %p39 = pneg %p33
    %p40 = scmp.eq.s32.totalorder %s10, 1
    %p41 = por %p39, %p40
    %p42 = scmp.ne.s32.totalorder %s34, %s37
    %p43 = scmp.eq.s32.totalorder %s10, 0
    %p44 = por %p42, %p43
    %p45 = scmp.ne.s32.totalorder %s34, %s37
    %p46 = scmp.eq.s32.totalorder %s15, 1
    %p47 = por %p45, %p46
    %p48 = scmp.ne.s32.totalorder %s37, %s38
    %p49 = scmp.eq.s32.totalorder %s15, 0
    %p50 = por %p48, %p49
    %p51 = scmp.ne.s32.totalorder %s37, %s38
    %p52 = scmp.eq.s32.totalorder %s16, 1
    %p53 = por %p51, %p52
    %p55 = scmp.ne.s32.totalorder %s38, %s54
    %p56 = scmp.eq.s32.totalorder %s16, 0
    %p57 = por %p55, %p56
    %s59 = sadd.s32 %s58, 1
    %p62 = scmp.eq.s32.totalorder %s10, 1
    %p63 = scmp.ne.s32.totalorder %s58, %s60
    %p64 = scmp.eq.s32.totalorder %s10, 0
    %p65 = por %p63, %p64
    %p66 = scmp.ne.s32.totalorder %s58, %s60
    %p67 = scmp.eq.s32.totalorder %s15, 1
    %p68 = por %p66, %p67
    %p69 = scmp.ne.s32.totalorder %s60, %s61
    %p70 = scmp.eq.s32.totalorder %s15, 0
    %p71 = por %p69, %p70
    %p72 = scmp.ne.s32.totalorder %s60, %s61
    %p73 = scmp.eq.s32.totalorder %s16, 1
    %p74 = por %p72, %p73
    %p76 = scmp.ne.s32.totalorder %s61, %s75
    %p77 = scmp.eq.s32.totalorder %s16, 0
    %p78 = por %p76, %p77
    %s79 = ssub.s32 %s17, %s29
    %s80 = ssub.s32 %s18, %s25
    %s81 = sor.u32 %s79, %s80
    %p82 = scmp.eq.s32.totalorder %s81, 0
    %s84 = sadd.s32 %s83, 1
    %s85 = scalar_select %p82, %s83, %s84
    %p88 = pneg %p82
    %p89 = scmp.eq.s32.totalorder %s10, 1
    %p90 = por %p88, %p89
    %p91 = scmp.ne.s32.totalorder %s83, %s86
    %p92 = scmp.eq.s32.totalorder %s10, 0
    %p93 = por %p91, %p92
    %p94 = scmp.ne.s32.totalorder %s83, %s86
    %p95 = scmp.eq.s32.totalorder %s15, 1
    %p96 = por %p94, %p95
    %p97 = scmp.ne.s32.totalorder %s86, %s87
    %p98 = scmp.eq.s32.totalorder %s15, 0
    %p99 = por %p97, %p98
    %p100 = scmp.ne.s32.totalorder %s86, %s87
    %p101 = scmp.eq.s32.totalorder %s16, 1
    %p102 = por %p100, %p101
    %p104 = scmp.ne.s32.totalorder %s87, %s103
    %p105 = scmp.eq.s32.totalorder %s16, 0
    %p106 = por %p104, %p105
    %s107 = ssub.s32 %s17, %s29
    %s108 = ssub.s32 %s18, %s25
    %s109 = sor.u32 %s107, %s108
    %p110 = scmp.eq.s32.totalorder %s109, 0
    %s112 = sadd.s32 %s111, 1
    %s113 = scalar_select %p110, %s111, %s112
    %p116 = pneg %p110
    %p117 = scmp.eq.s32.totalorder %s10, 1
    %p118 = por %p116, %p117
    %p119 = scmp.ne.s32.totalorder %s111, %s114
    %p120 = scmp.eq.s32.totalorder %s10, 0
    %p121 = por %p119, %p120
    %p122 = scmp.ne.s32.totalorder %s111, %s114
    %p123 = scmp.eq.s32.totalorder %s15, 1
    %p124 = por %p122, %p123
    %p125 = scmp.ne.s32.totalorder %s114, %s115
    %p126 = scmp.eq.s32.totalorder %s15, 0
    %p127 = por %p125, %p126
    %p128 = scmp.ne.s32.totalorder %s114, %s115
    %p129 = scmp.eq.s32.totalorder %s16, 1
    %p130 = por %p128, %p129
    %p132 = scmp.ne.s32.totalorder %s115, %s131
    %p133 = scmp.eq.s32.totalorder %s16, 0
    %p134 = por %p132, %p133
    %p135 = scmp.le.s32.totalorder 1, %s10
    %p136 = scmp.lt.s32.totalorder %s10, 3
    %p137 = pnand %p135, %p136
    %p138 = pneg %p137
    // Predicated region
    $region9: #{tpu_custom_call.1} parent=5 // pred_check
      _
    $region10: #{tpu_custom_call.1} parent=5 // pred_check_branch
      %140 = sbr.rel (%p137) target = $region12
    $region11: #{tpu_custom_call.1} parent=5 // pred_region
      %s141 = ssub.s32 %s10, 1
      // Predicated region
      $region13: #{tpu_custom_call.1} parent=11 // pred_check
        %p142 = pneg %p71
      $region14: #{tpu_custom_call.1} parent=11 // pred_check_branch
        %144 = sbr.rel (%p142) target = $region16
      $region15: #{tpu_custom_call.1} parent=11 // pred_region
        _
      $region16: #{tpu_custom_call.1} parent=11 // pred_fallthru
        _
    $region12: #{tpu_custom_call.1} parent=5 // pred_fallthru
      _
    %p145 = scmp.lt.s32.totalorder %s10, 2
    // Predicated region
    $region17: #{tpu_custom_call.1} parent=5 // pred_check
      %p146 = pneg %p145
    $region18: #{tpu_custom_call.1} parent=5 // pred_check_branch
      %148 = sbr.rel (%p146) target = $region20
    $region19: #{tpu_custom_call.1} parent=5 // pred_region
      // Predicated region
      $region21: #{tpu_custom_call.1} parent=19 // pred_check
        %p149 = pneg %p44
      $region22: #{tpu_custom_call.1} parent=19 // pred_check_branch
        %151 = sbr.rel (%p149) target = $region24
      $region23: #{tpu_custom_call.1} parent=19 // pred_region
        %s152 = smul.u32 2, %s18
        %p153 = scmp.lt.s32.totalorder %s17, 1
        %s154 = scalar_select %p153, %s17, 1
        %p155 = scmp.lt.s32.totalorder %s152, 1
        %s156 = scalar_select %p155, %s152, 1
        %s157 = smul.addr %s154, 2
        %s158 = sadd.s32 %s156, %s157
        %s159 = scalar_lea.vmem %s0, %s158
        %s160 = smul.u32 2, %s18
      $region24: #{tpu_custom_call.1} parent=19 // pred_fallthru
        _
    $region20: #{tpu_custom_call.1} parent=5 // pred_fallthru
      _
    %p161 = scmp.le.s32.totalorder 1, %s10
    %p162 = scmp.lt.s32.totalorder %s10, 3
    %p163 = pnand %p161, %p162
    %p164 = pneg %p163
    // Predicated region
    $region25: #{tpu_custom_call.1} parent=5 // pred_check
      _
    $region26: #{tpu_custom_call.1} parent=5 // pred_check_branch
      %166 = sbr.rel (%p163) target = $region28
    $region27: #{tpu_custom_call.1} parent=5 // pred_region
      %s167 = ssub.s32 %s10, 1
      %s168 = smul.u32 2, %s20
      %p169 = scmp.lt.s32.totalorder %s19, 1
      %s170 = scalar_select %p169, %s19, 1
      %p171 = scmp.lt.s32.totalorder %s168, 1
      %s172 = scalar_select %p171, %s168, 1
      %s173 = smul.addr %s170, 2
      %s174 = sadd.s32 %s172, %s173
      %s175 = scalar_lea.vmem %s0, %s174
      %p176 = pneg %p50
      %p177 = pneg %p47
      %p178 = pneg %p71
      %p179 = pneg %p68
      %p180 = pneg %p99
      %p181 = pneg %p96
      %s182 = smul.u32 32, %s20
      %p183 = scmp.lt.s32.totalorder %s19, 1
      %s184 = scalar_select %p183, %s19, 1
      %p185 = scmp.lt.s32.totalorder %s182, 31
      %s186 = scalar_select %p185, %s182, 31
      %s187 = smul.addr %s184, 32
      %s188 = sadd.s32 %s186, %s187
      %s189 = smul.addr %s188, 8
      %s190 = scalar_lea.vmem %s2, %s189
      %p191 = pneg %p127
      %p192 = pneg %p124
      %s193 = smul.u32 32, %s20
      %p194 = scmp.lt.s32.totalorder %s19, 1
      %s195 = scalar_select %p194, %s19, 1
      %p196 = scmp.lt.s32.totalorder %s193, 31
      %s197 = scalar_select %p196, %s193, 31
      %s198 = smul.addr %s195, 32
      %s199 = sadd.s32 %s197, %s198
      %s200 = smul.addr %s199, 8
      %s201 = scalar_lea.vmem %s3, %s200
      %s202 = smul.u32 2, %s20
      %p203 = scmp.lt.s32.totalorder %s19, 1
      %s204 = scalar_select %p203, %s19, 1
      %p205 = scmp.lt.s32.totalorder %s202, 1
      %s206 = scalar_select %p205, %s202, 1
      %s207 = smul.addr %s204, 2
      %s208 = sadd.s32 %s206, %s207
      %s209 = scalar_lea.vmem %s0, %s208
      %s210 = smul.u32 2, %s20
      %s211 = smul.u32 32, %s20
      %p212 = scmp.lt.s32.totalorder %s19, 1
      %s213 = scalar_select %p212, %s19, 1
      %p214 = scmp.lt.s32.totalorder %s211, 31
      %s215 = scalar_select %p214, %s211, 31
      %s216 = smul.addr %s213, 32
      %s217 = sadd.s32 %s215, %s216
      %s218 = smul.addr %s217, 8
      %s219 = scalar_lea.vmem %s2, %s218
      %s220 = smul.u32 32, %s20
      %s221 = smul.u32 32, %s20
      %p222 = scmp.lt.s32.totalorder %s19, 1
      %s223 = scalar_select %p222, %s19, 1
      %p224 = scmp.lt.s32.totalorder %s221, 31
      %s225 = scalar_select %p224, %s221, 31
      %s226 = smul.addr %s223, 32
      %s227 = sadd.s32 %s225, %s226
      %s228 = smul.addr %s227, 8
      %s229 = scalar_lea.vmem %s3, %s228
      %s230 = smul.u32 32, %s20
      %v231 = vld [vmem:[%s209] sm:$0x3]
      %v232 = vcvt.s32.f32 %v231
      %v233 = vld [vmem:[%s1] sm:$0xff]
      %v234 = vld [vmem:[%s1 + $0x8] sm:$0xff]
      %236 = vset.pattern.permute.xlu0 0
      %237 = vperm.xlu0 %236, %v233
      %v238 = vpop.permute.xlu0 %237
      %241 = vset.pattern.permute.xlu0 0
      %242 = vperm.xlu0 %241, %v234
      %v243 = vpop.permute.xlu0 %242
      %v246 = vperm.slane %v232, 0
      %v247 = vperm.slane %v232, 1
      %v250 = vmul.f32 %v238, %v246
      %v251 = vmul.f32 %v238, %v247
      %v252 = vmul.f32 %v243, %v246
      %v253 = vmul.f32 %v243, %v247
      %v254 = vand.u32 2147483647, %v250
      %vm255 = vcmp.le.f32.partialorder %v254, 0.7853982
      %vm256 = vcmp.lt.s32.totalorder %v250, 0
      %v257 = vand.u32 %v250, 2139095040
      %v258 = vshrl.u32 %v257, 23
      %v259 = vsub.s32 %v258, 127
      %v260 = vand.u32 2147483647, %v250
      %v261 = vand.u32 %v260, 8388607
      %v262 = vor.u32 %v261, 8388608
      %v263 = vsub.s32 0, %v262
      %v264 = vadd.s32 %v259, 1
      %vm265 = vcmp.gt.s32.totalorder %v264, 0
      %v266 = vsel %vm265, %v264, 0
      %v267 = vshrl.u32 %v266, 5
      %v268 = vand.u32 %v266, 31
      %v269 = vsub.s32 32, %v268
      %v270 = vshrl.u32 683565275, %v269
      %v271 = vshll.u32 683565275, %v268
      %v272 = vshrl.u32 2475754826, %v269
      %v273 = vor.u32 %v271, %v272
      %v274 = vshll.u32 2475754826, %v268
      %v275 = vshrl.u32 2131351028, %v269
      %v276 = vor.u32 %v274, %v275
      %v277 = vshll.u32 2131351028, %v268
      %v278 = vshrl.u32 2102212464, %v269
      %v279 = vor.u32 %v277, %v278
      %v280 = vshll.u32 2102212464, %v268
      %v281 = vshrl.u32 920167782, %v269
      %v282 = vor.u32 %v280, %v281
      %v283 = vshll.u32 920167782, %v268
      %v284 = vshrl.u32 1326507024, %v269
      %v285 = vor.u32 %v283, %v284
      %vm286 = vcmp.lt.s32.totalorder %v267, 1
      %vm287 = vcmp.lt.s32.totalorder %v267, 2
      %vm288 = vcmp.lt.s32.totalorder %v267, 3
      %vm289 = vcmp.lt.s32.totalorder %v267, 4
      %v290 = vsel %vm286, %v270, %v273
      %v291 = vsel %vm289, %v279, 2102212464
      %v292 = vsel %vm288, %v276, %v291
      %v293 = vsel %vm287, %v290, %v292
      %v294 = vsel %vm286, %v273, %v276
      %v295 = vsel %vm289, %v282, 920167782
      %v296 = vsel %vm288, %v279, %v295
      %v297 = vsel %vm287, %v294, %v296
      %v298 = vsel %vm286, %v276, %v279
      %v299 = vsel %vm289, %v285, 1326507024
      %v300 = vsel %vm288, %v282, %v299
      %v301 = vsel %vm287, %v298, %v300
      %v302 = vshll.u32 %v262, 8
      %v303 = vand.u32 %v302, 65535
      %v304 = vshrl.u32 %v302, 16
      %v305 = vand.u32 %v301, 65535
      %v306 = vshrl.u32 %v301, 16
      %v307 = vmul.u32 %v303, %v305
      %v308 = vmul.u32 %v303, %v306
      %v309 = vmul.u32 %v304, %v305
      %v310 = vmul.u32 %v304, %v306
      %v311 = vshll.u32 %v308, 16
      %v312 = vshrl.u32 %v308, 16
      %v313 = vshll.u32 %v309, 16
      %v314 = vshrl.u32 %v309, 16
      %vm315 = vc.u32 %v307, %v311
      %v316 = vsel %vm315, 1, 0
      %v317 = vadd.s32 %v307, %v311
      %v318 = vadd.s32 %v310, %v316
      %vm319 = vc.u32 %v317, %v313
      %v320 = vsel %vm319, 1, 0
      %v321 = vadd.s32 %v317, %v313
      %v322 = vadd.s32 %v318, %v320
      %v323 = vadd.s32 %v322, %v312
      %v324 = vadd.s32 %v323, %v314
      %v325 = vand.u32 %v302, 65535
      %v326 = vshrl.u32 %v302, 16
      %v327 = vand.u32 %v297, 65535
      %v328 = vshrl.u32 %v297, 16
      %v329 = vmul.u32 %v325, %v327
      %v330 = vmul.u32 %v325, %v328
      %v331 = vmul.u32 %v326, %v327
      %v332 = vmul.u32 %v326, %v328
      %v333 = vshll.u32 %v330, 16
      %v334 = vshrl.u32 %v330, 16
      %v335 = vshll.u32 %v331, 16
      %v336 = vshrl.u32 %v331, 16
      %vm337 = vc.u32 %v329, %v333
      %v338 = vsel %vm337, 1, 0
      %v339 = vadd.s32 %v329, %v333
      %v340 = vadd.s32 %v332, %v338
      %vm341 = vc.u32 %v339, %v335
      %v342 = vsel %vm341, 1, 0
      %v343 = vadd.s32 %v339, %v335
      %v344 = vadd.s32 %v340, %v342
      %v345 = vadd.s32 %v344, %v334
      %v346 = vadd.s32 %v345, %v336
      %v347 = vmul.u32 %v302, %v293
      %v348 = vadd.s32 %v324, %v343
      %vm349 = vc.u32 %v324, %v343
      %v350 = vadd.s32 %v346, 1
      %v351 = vsel %vm349, %v350, %v346
      %v352 = vadd.s32 %v347, %v351
      %v353 = vadd.s32 %v352, 536870912
      %v354 = vshrl.u32 %v353, 30
      %v355 = vshll.u32 %v354, 30
      %v356 = vsub.s32 %v352, %v355
      %vm357 = vcmp.lt.s32.totalorder %v356, 0
      %v358 = vsub.s32 0, %v356
      %v359 = vsel %vm357, %v358, %v356
      %v360 = vclz %v359
      %v361 = vsub.s32 %v360, 2
      %vm362 = vcmp.gt.s32.totalorder 0, %v361
      %v363 = vsel %vm362, 0, %v361
      %v364 = vsub.s32 32, %v363
      %v365 = vshll.u32 %v356, %v363
      %v366 = vshrl.u32 %v348, %v364
      %v367 = vor.u32 %v365, %v366
      %v368 = vsub.s32 4294967266, %v363
      %v369 = vadd.s32 %v368, 127
      %v370 = vshll.u32 %v369, 23
      %v371 = vor.u32 4788187, %v370
      %v372 = vand.u32 2147483647, %v371
      %v374 = vcvt.s32.f32 %v367
      %v375 = vmul.f32 %v374, %v372
      %v376 = vxor.u32 %v375, 2147483648
      %v377 = vsel %vm256, %v376, %v375
      %v378 = vsub.s32 4, %v354
      %v379 = vsel %vm256, %v378, %v354
      %v380 = vsel %vm255, %v250, %v377
      %v381 = vsel %vm255, 0, %v379
      %v382 = vmul.f32 %v380, %v380
      %v383 = vmul.f32 %v382, -0.001358992
      %v384 = vadd.f32 %v383, 0.041655596
      %v385 = vmul.f32 %v382, %v384
      %v386 = vadd.f32 %v385, -0.4999988
      %v387 = vmul.f32 %v382, %v386
      %v388 = vadd.f32 1.0, %v387
      %v389 = vmul.f32 %v380, %v380
      %v390 = vmul.f32 %v389, -0.00019511016
      %v391 = vadd.f32 %v390, 0.008332121
      %v392 = vmul.f32 %v389, %v391
      %v393 = vadd.f32 %v392, -0.16666654
      %v394 = vmul.f32 %v389, %v393
      %v395 = vadd.f32 %v394, 1.0
      %v396 = vmul.f32 %v395, %v380
      %vm397 = vweird.f32 %v250
      %v398 = vand.u32 %v381, 3
      %vm399 = vcmp.lt.s32.totalorder %v398, 2
      %vm400 = vcmp.eq.s32.totalorder %v398, 0
      %v401 = vxor.u32 %v396, 2147483648
      %v402 = vsel %vm400, %v388, %v401
      %vm403 = vcmp.eq.s32.totalorder %v398, 2
      %v404 = vxor.u32 %v388, 2147483648
      %v405 = vsel %vm403, %v404, %v396
      %v406 = vsel %vm399, %v402, %v405
      %v407 = vsel %vm397, nan, %v406
      %v408 = vand.u32 2147483647, %v251
      %vm409 = vcmp.le.f32.partialorder %v408, 0.7853982
      %vm410 = vcmp.lt.s32.totalorder %v251, 0
      %v411 = vand.u32 %v251, 2139095040
      %v412 = vshrl.u32 %v411, 23
      %v413 = vsub.s32 %v412, 127
      %v414 = vand.u32 2147483647, %v251
      %v415 = vand.u32 %v414, 8388607
      %v416 = vor.u32 %v415, 8388608
      %v417 = vsub.s32 0, %v416
      %v418 = vadd.s32 %v413, 1
      %vm419 = vcmp.gt.s32.totalorder %v418, 0
      %v420 = vsel %vm419, %v418, 0
      %v421 = vshrl.u32 %v420, 5
      %v422 = vand.u32 %v420, 31
      %v423 = vsub.s32 32, %v422
      %v424 = vshrl.u32 683565275, %v423
      %v425 = vshll.u32 683565275, %v422
      %v426 = vshrl.u32 2475754826, %v423
      %v427 = vor.u32 %v425, %v426
      %v428 = vshll.u32 2475754826, %v422
      %v429 = vshrl.u32 2131351028, %v423
      %v430 = vor.u32 %v428, %v429
      %v431 = vshll.u32 2131351028, %v422
      %v432 = vshrl.u32 2102212464, %v423
      %v433 = vor.u32 %v431, %v432
      %v434 = vshll.u32 2102212464, %v422
      %v435 = vshrl.u32 920167782, %v423
      %v436 = vor.u32 %v434, %v435
      %v437 = vshll.u32 920167782, %v422
      %v438 = vshrl.u32 1326507024, %v423
      %v439 = vor.u32 %v437, %v438
      %vm440 = vcmp.lt.s32.totalorder %v421, 1
      %vm441 = vcmp.lt.s32.totalorder %v421, 2
      %vm442 = vcmp.lt.s32.totalorder %v421, 3
      %vm443 = vcmp.lt.s32.totalorder %v421, 4
      %v444 = vsel %vm440, %v424, %v427
      %v445 = vsel %vm443, %v433, 2102212464
      %v446 = vsel %vm442, %v430, %v445
      %v447 = vsel %vm441, %v444, %v446
      %v448 = vsel %vm440, %v427, %v430
      %v449 = vsel %vm443, %v436, 920167782
      %v450 = vsel %vm442, %v433, %v449
      %v451 = vsel %vm441, %v448, %v450
      %v452 = vsel %vm440, %v430, %v433
      %v453 = vsel %vm443, %v439, 1326507024
      %v454 = vsel %vm442, %v436, %v453
      %v455 = vsel %vm441, %v452, %v454
      %v456 = vshll.u32 %v416, 8
      %v457 = vand.u32 %v456, 65535
      %v458 = vshrl.u32 %v456, 16
      %v459 = vand.u32 %v455, 65535
      %v460 = vshrl.u32 %v455, 16
      %v461 = vmul.u32 %v457, %v459
      %v462 = vmul.u32 %v457, %v460
      %v463 = vmul.u32 %v458, %v459
      %v464 = vmul.u32 %v458, %v460
      %v465 = vshll.u32 %v462, 16
      %v466 = vshrl.u32 %v462, 16
      %v467 = vshll.u32 %v463, 16
      %v468 = vshrl.u32 %v463, 16
      %vm469 = vc.u32 %v461, %v465
      %v470 = vsel %vm469, 1, 0
      %v471 = vadd.s32 %v461, %v465
      %v472 = vadd.s32 %v464, %v470
      %vm473 = vc.u32 %v471, %v467
      %v474 = vsel %vm473, 1, 0
      %v475 = vadd.s32 %v471, %v467
      %v476 = vadd.s32 %v472, %v474
      %v477 = vadd.s32 %v476, %v466
      %v478 = vadd.s32 %v477, %v468
      %v479 = vand.u32 %v456, 65535
      %v480 = vshrl.u32 %v456, 16
      %v481 = vand.u32 %v451, 65535
      %v482 = vshrl.u32 %v451, 16
      %v483 = vmul.u32 %v479, %v481
      %v484 = vmul.u32 %v479, %v482
      %v485 = vmul.u32 %v480, %v481
      %v486 = vmul.u32 %v480, %v482
      %v487 = vshll.u32 %v484, 16
      %v488 = vshrl.u32 %v484, 16
      %v489 = vshll.u32 %v485, 16
      %v490 = vshrl.u32 %v485, 16
      %vm491 = vc.u32 %v483, %v487
      %v492 = vsel %vm491, 1, 0
      %v493 = vadd.s32 %v483, %v487
      %v494 = vadd.s32 %v486, %v492
      %vm495 = vc.u32 %v493, %v489
      %v496 = vsel %vm495, 1, 0
      %v497 = vadd.s32 %v493, %v489
      %v498 = vadd.s32 %v494, %v496
      %v499 = vadd.s32 %v498, %v488
      %v500 = vadd.s32 %v499, %v490
      %v501 = vmul.u32 %v456, %v447
      %v502 = vadd.s32 %v478, %v497
      %vm503 = vc.u32 %v478, %v497
      %v504 = vadd.s32 %v500, 1
      %v505 = vsel %vm503, %v504, %v500
      %v506 = vadd.s32 %v501, %v505
      %v507 = vadd.s32 %v506, 536870912
      %v508 = vshrl.u32 %v507, 30
      %v509 = vshll.u32 %v508, 30
      %v510 = vsub.s32 %v506, %v509
      %vm511 = vcmp.lt.s32.totalorder %v510, 0
      %v512 = vsub.s32 0, %v510
      %v513 = vsel %vm511, %v512, %v510
      %v514 = vclz %v513
      %v515 = vsub.s32 %v514, 2
      %vm516 = vcmp.gt.s32.totalorder 0, %v515
      %v517 = vsel %vm516, 0, %v515
      %v518 = vsub.s32 32, %v517
      %v519 = vshll.u32 %v510, %v517
      %v520 = vshrl.u32 %v502, %v518
      %v521 = vor.u32 %v519, %v520
      %v522 = vsub.s32 4294967266, %v517
      %v523 = vadd.s32 %v522, 127
      %v524 = vshll.u32 %v523, 23
      %v525 = vor.u32 4788187, %v524
      %v526 = vand.u32 2147483647, %v525
      %v528 = vcvt.s32.f32 %v521
      %v529 = vmul.f32 %v528, %v526
      %v530 = vxor.u32 %v529, 2147483648
      %v531 = vsel %vm410, %v530, %v529
      %v532 = vsub.s32 4, %v508
      %v533 = vsel %vm410, %v532, %v508
      %v534 = vsel %vm409, %v251, %v531
      %v535 = vsel %vm409, 0, %v533
      %v536 = vmul.f32 %v534, %v534
      %v537 = vmul.f32 %v536, -0.001358992
      %v538 = vadd.f32 %v537, 0.041655596
      %v539 = vmul.f32 %v536, %v538
      %v540 = vadd.f32 %v539, -0.4999988
      %v541 = vmul.f32 %v536, %v540
      %v542 = vadd.f32 1.0, %v541
      %v543 = vmul.f32 %v534, %v534
      %v544 = vmul.f32 %v543, -0.00019511016
      %v545 = vadd.f32 %v544, 0.008332121
      %v546 = vmul.f32 %v543, %v545
      %v547 = vadd.f32 %v546, -0.16666654
      %v548 = vmul.f32 %v543, %v547
      %v549 = vadd.f32 %v548, 1.0
      %v550 = vmul.f32 %v549, %v534
      %vm551 = vweird.f32 %v251
      %v552 = vand.u32 %v535, 3
      %vm553 = vcmp.lt.s32.totalorder %v552, 2
      %vm554 = vcmp.eq.s32.totalorder %v552, 0
      %v555 = vxor.u32 %v550, 2147483648
      %v556 = vsel %vm554, %v542, %v555
      %vm557 = vcmp.eq.s32.totalorder %v552, 2
      %v558 = vxor.u32 %v542, 2147483648
      %v559 = vsel %vm557, %v558, %v550
      %v560 = vsel %vm553, %v556, %v559
      %v561 = vsel %vm551, nan, %v560
      %v562 = vand.u32 2147483647, %v252
      %vm563 = vcmp.le.f32.partialorder %v562, 0.7853982
      %vm564 = vcmp.lt.s32.totalorder %v252, 0
      %v565 = vand.u32 %v252, 2139095040
      %v566 = vshrl.u32 %v565, 23
      %v567 = vsub.s32 %v566, 127
      %v568 = vand.u32 2147483647, %v252
      %v569 = vand.u32 %v568, 8388607
      %v570 = vor.u32 %v569, 8388608
      %v571 = vsub.s32 0, %v570
      %v572 = vadd.s32 %v567, 1
      %vm573 = vcmp.gt.s32.totalorder %v572, 0
      %v574 = vsel %vm573, %v572, 0
      %v575 = vshrl.u32 %v574, 5
      %v576 = vand.u32 %v574, 31
      %v577 = vsub.s32 32, %v576
      %v578 = vshrl.u32 683565275, %v577
      %v579 = vshll.u32 683565275, %v576
      %v580 = vshrl.u32 2475754826, %v577
      %v581 = vor.u32 %v579, %v580
      %v582 = vshll.u32 2475754826, %v576
      %v583 = vshrl.u32 2131351028, %v577
      %v584 = vor.u32 %v582, %v583
      %v585 = vshll.u32 2131351028, %v576
      %v586 = vshrl.u32 2102212464, %v577
      %v587 = vor.u32 %v585, %v586
      %v588 = vshll.u32 2102212464, %v576
      %v589 = vshrl.u32 920167782, %v577
      %v590 = vor.u32 %v588, %v589
      %v591 = vshll.u32 920167782, %v576
      %v592 = vshrl.u32 1326507024, %v577
      %v593 = vor.u32 %v591, %v592
      %vm594 = vcmp.lt.s32.totalorder %v575, 1
      %vm595 = vcmp.lt.s32.totalorder %v575, 2
      %vm596 = vcmp.lt.s32.totalorder %v575, 3
      %vm597 = vcmp.lt.s32.totalorder %v575, 4
      %v598 = vsel %vm594, %v578, %v581
      %v599 = vsel %vm597, %v587, 2102212464
      %v600 = vsel %vm596, %v584, %v599
      %v601 = vsel %vm595, %v598, %v600
      %v602 = vsel %vm594, %v581, %v584
      %v603 = vsel %vm597, %v590, 920167782
      %v604 = vsel %vm596, %v587, %v603
      %v605 = vsel %vm595, %v602, %v604
      %v606 = vsel %vm594, %v584, %v587
      %v607 = vsel %vm597, %v593, 1326507024
      %v608 = vsel %vm596, %v590, %v607
      %v609 = vsel %vm595, %v606, %v608
      %v610 = vshll.u32 %v570, 8
      %v611 = vand.u32 %v610, 65535
      %v612 = vshrl.u32 %v610, 16
      %v613 = vand.u32 %v609, 65535
      %v614 = vshrl.u32 %v609, 16
      %v615 = vmul.u32 %v611, %v613
      %v616 = vmul.u32 %v611, %v614
      %v617 = vmul.u32 %v612, %v613
      %v618 = vmul.u32 %v612, %v614
      %v619 = vshll.u32 %v616, 16
      %v620 = vshrl.u32 %v616, 16
      %v621 = vshll.u32 %v617, 16
      %v622 = vshrl.u32 %v617, 16
      %vm623 = vc.u32 %v615, %v619
      %v624 = vsel %vm623, 1, 0
      %v625 = vadd.s32 %v615, %v619
      %v626 = vadd.s32 %v618, %v624
      %vm627 = vc.u32 %v625, %v621
      %v628 = vsel %vm627, 1, 0
      %v629 = vadd.s32 %v625, %v621
      %v630 = vadd.s32 %v626, %v628
      %v631 = vadd.s32 %v630, %v620
      %v632 = vadd.s32 %v631, %v622
      %v633 = vand.u32 %v610, 65535
      %v634 = vshrl.u32 %v610, 16
      %v635 = vand.u32 %v605, 65535
      %v636 = vshrl.u32 %v605, 16
      %v637 = vmul.u32 %v633, %v635
      %v638 = vmul.u32 %v633, %v636
      %v639 = vmul.u32 %v634, %v635
      %v640 = vmul.u32 %v634, %v636
      %v641 = vshll.u32 %v638, 16
      %v642 = vshrl.u32 %v638, 16
      %v643 = vshll.u32 %v639, 16
      %v644 = vshrl.u32 %v639, 16
      %vm645 = vc.u32 %v637, %v641
      %v646 = vsel %vm645, 1, 0
      %v647 = vadd.s32 %v637, %v641
      %v648 = vadd.s32 %v640, %v646
      %vm649 = vc.u32 %v647, %v643
      %v650 = vsel %vm649, 1, 0
      %v651 = vadd.s32 %v647, %v643
      %v652 = vadd.s32 %v648, %v650
      %v653 = vadd.s32 %v652, %v642
      %v654 = vadd.s32 %v653, %v644
      %v655 = vmul.u32 %v610, %v601
      %v656 = vadd.s32 %v632, %v651
      %vm657 = vc.u32 %v632, %v651
      %v658 = vadd.s32 %v654, 1
      %v659 = vsel %vm657, %v658, %v654
      %v660 = vadd.s32 %v655, %v659
      %v661 = vadd.s32 %v660, 536870912
      %v662 = vshrl.u32 %v661, 30
      %v663 = vshll.u32 %v662, 30
      %v664 = vsub.s32 %v660, %v663
      %vm665 = vcmp.lt.s32.totalorder %v664, 0
      %v666 = vsub.s32 0, %v664
      %v667 = vsel %vm665, %v666, %v664
      %v668 = vclz %v667
      %v669 = vsub.s32 %v668, 2
      %vm670 = vcmp.gt.s32.totalorder 0, %v669
      %v671 = vsel %vm670, 0, %v669
      %v672 = vsub.s32 32, %v671
      %v673 = vshll.u32 %v664, %v671
      %v674 = vshrl.u32 %v656, %v672
      %v675 = vor.u32 %v673, %v674
      %v676 = vsub.s32 4294967266, %v671
      %v677 = vadd.s32 %v676, 127
      %v678 = vshll.u32 %v677, 23
      %v679 = vor.u32 4788187, %v678
      %v680 = vand.u32 2147483647, %v679
      %v682 = vcvt.s32.f32 %v675
      %v683 = vmul.f32 %v682, %v680
      %v684 = vxor.u32 %v683, 2147483648
      %v685 = vsel %vm564, %v684, %v683
      %v686 = vsub.s32 4, %v662
      %v687 = vsel %vm564, %v686, %v662
      %v688 = vsel %vm563, %v252, %v685
      %v689 = vsel %vm563, 0, %v687
      %v690 = vmul.f32 %v688, %v688
      %v691 = vmul.f32 %v690, -0.001358992
      %v692 = vadd.f32 %v691, 0.041655596
      %v693 = vmul.f32 %v690, %v692
      %v694 = vadd.f32 %v693, -0.4999988
      %v695 = vmul.f32 %v690, %v694
      %v696 = vadd.f32 1.0, %v695
      %v697 = vmul.f32 %v688, %v688
      %v698 = vmul.f32 %v697, -0.00019511016
      %v699 = vadd.f32 %v698, 0.008332121
      %v700 = vmul.f32 %v697, %v699
      %v701 = vadd.f32 %v700, -0.16666654
      %v702 = vmul.f32 %v697, %v701
      %v703 = vadd.f32 %v702, 1.0
      %v704 = vmul.f32 %v703, %v688
      %vm705 = vweird.f32 %v252
      %v706 = vand.u32 %v689, 3
      %vm707 = vcmp.lt.s32.totalorder %v706, 2
      %vm708 = vcmp.eq.s32.totalorder %v706, 0
      %v709 = vxor.u32 %v704, 2147483648
      %v710 = vsel %vm708, %v696, %v709
      %vm711 = vcmp.eq.s32.totalorder %v706, 2
      %v712 = vxor.u32 %v696, 2147483648
      %v713 = vsel %vm711, %v712, %v704
      %v714 = vsel %vm707, %v710, %v713
      %v715 = vsel %vm705, nan, %v714
      %v716 = vand.u32 2147483647, %v253
      %vm717 = vcmp.le.f32.partialorder %v716, 0.7853982
      %vm718 = vcmp.lt.s32.totalorder %v253, 0
      %v719 = vand.u32 %v253, 2139095040
      %v720 = vshrl.u32 %v719, 23
      %v721 = vsub.s32 %v720, 127
      %v722 = vand.u32 2147483647, %v253
      %v723 = vand.u32 %v722, 8388607
      %v724 = vor.u32 %v723, 8388608
      %v725 = vsub.s32 0, %v724
      %v726 = vadd.s32 %v721, 1
      %vm727 = vcmp.gt.s32.totalorder %v726, 0
      %v728 = vsel %vm727, %v726, 0
      %v729 = vshrl.u32 %v728, 5
      %v730 = vand.u32 %v728, 31
      %v731 = vsub.s32 32, %v730
      %v732 = vshrl.u32 683565275, %v731
      %v733 = vshll.u32 683565275, %v730
      %v734 = vshrl.u32 2475754826, %v731
      %v735 = vor.u32 %v733, %v734
      %v736 = vshll.u32 2475754826, %v730
      %v737 = vshrl.u32 2131351028, %v731
      %v738 = vor.u32 %v736, %v737
      %v739 = vshll.u32 2131351028, %v730
      %v740 = vshrl.u32 2102212464, %v731
      %v741 = vor.u32 %v739, %v740
      %v742 = vshll.u32 2102212464, %v730
      %v743 = vshrl.u32 920167782, %v731
      %v744 = vor.u32 %v742, %v743
      %v745 = vshll.u32 920167782, %v730
      %v746 = vshrl.u32 1326507024, %v731
      %v747 = vor.u32 %v745, %v746
      %vm748 = vcmp.lt.s32.totalorder %v729, 1
      %vm749 = vcmp.lt.s32.totalorder %v729, 2
      %vm750 = vcmp.lt.s32.totalorder %v729, 3
      %vm751 = vcmp.lt.s32.totalorder %v729, 4
      %v752 = vsel %vm748, %v732, %v735
      %v753 = vsel %vm751, %v741, 2102212464
      %v754 = vsel %vm750, %v738, %v753
      %v755 = vsel %vm749, %v752, %v754
      %v756 = vsel %vm748, %v735, %v738
      %v757 = vsel %vm751, %v744, 920167782
      %v758 = vsel %vm750, %v741, %v757
      %v759 = vsel %vm749, %v756, %v758
      %v760 = vsel %vm748, %v738, %v741
      %v761 = vsel %vm751, %v747, 1326507024
      %v762 = vsel %vm750, %v744, %v761
      %v763 = vsel %vm749, %v760, %v762
      %v764 = vshll.u32 %v724, 8
      %v765 = vand.u32 %v764, 65535
      %v766 = vshrl.u32 %v764, 16
      %v767 = vand.u32 %v763, 65535
      %v768 = vshrl.u32 %v763, 16
      %v769 = vmul.u32 %v765, %v767
      %v770 = vmul.u32 %v765, %v768
      %v771 = vmul.u32 %v766, %v767
      %v772 = vmul.u32 %v766, %v768
      %v773 = vshll.u32 %v770, 16
      %v774 = vshrl.u32 %v770, 16
      %v775 = vshll.u32 %v771, 16
      %v776 = vshrl.u32 %v771, 16
      %vm777 = vc.u32 %v769, %v773
      %v778 = vsel %vm777, 1, 0
      %v779 = vadd.s32 %v769, %v773
      %v780 = vadd.s32 %v772, %v778
      %vm781 = vc.u32 %v779, %v775
      %v782 = vsel %vm781, 1, 0
      %v783 = vadd.s32 %v779, %v775
      %v784 = vadd.s32 %v780, %v782
      %v785 = vadd.s32 %v784, %v774
      %v786 = vadd.s32 %v785, %v776
      %v787 = vand.u32 %v764, 65535
      %v788 = vshrl.u32 %v764, 16
      %v789 = vand.u32 %v759, 65535
      %v790 = vshrl.u32 %v759, 16
      %v791 = vmul.u32 %v787, %v789
      %v792 = vmul.u32 %v787, %v790
      %v793 = vmul.u32 %v788, %v789
      %v794 = vmul.u32 %v788, %v790
      %v795 = vshll.u32 %v792, 16
      %v796 = vshrl.u32 %v792, 16
      %v797 = vshll.u32 %v793, 16
      %v798 = vshrl.u32 %v793, 16
      %vm799 = vc.u32 %v791, %v795
      %v800 = vsel %vm799, 1, 0
      %v801 = vadd.s32 %v791, %v795
      %v802 = vadd.s32 %v794, %v800
      %vm803 = vc.u32 %v801, %v797
      %v804 = vsel %vm803, 1, 0
      %v805 = vadd.s32 %v801, %v797
      %v806 = vadd.s32 %v802, %v804
      %v807 = vadd.s32 %v806, %v796
      %v808 = vadd.s32 %v807, %v798
      %v809 = vmul.u32 %v764, %v755
      %v810 = vadd.s32 %v786, %v805
      %vm811 = vc.u32 %v786, %v805
      %v812 = vadd.s32 %v808, 1
      %v813 = vsel %vm811, %v812, %v808
      %v814 = vadd.s32 %v809, %v813
      %v815 = vadd.s32 %v814, 536870912
      %v816 = vshrl.u32 %v815, 30
      %v817 = vshll.u32 %v816, 30
      %v818 = vsub.s32 %v814, %v817
      %vm819 = vcmp.lt.s32.totalorder %v818, 0
      %v820 = vsub.s32 0, %v818
      %v821 = vsel %vm819, %v820, %v818
      %v822 = vclz %v821
      %v823 = vsub.s32 %v822, 2
      %vm824 = vcmp.gt.s32.totalorder 0, %v823
      %v825 = vsel %vm824, 0, %v823
      %v826 = vsub.s32 32, %v825
      %v827 = vshll.u32 %v818, %v825
      %v828 = vshrl.u32 %v810, %v826
      %v829 = vor.u32 %v827, %v828
      %v830 = vsub.s32 4294967266, %v825
      %v831 = vadd.s32 %v830, 127
      %v832 = vshll.u32 %v831, 23
      %v833 = vor.u32 4788187, %v832
      %v834 = vand.u32 2147483647, %v833
      %v836 = vcvt.s32.f32 %v829
      %v837 = vmul.f32 %v836, %v834
      %v838 = vxor.u32 %v837, 2147483648
      %v839 = vsel %vm718, %v838, %v837
      %v840 = vsub.s32 4, %v816
      %v841 = vsel %vm718, %v840, %v816
      %v842 = vsel %vm717, %v253, %v839
      %v843 = vsel %vm717, 0, %v841
      %v844 = vmul.f32 %v842, %v842
      %v845 = vmul.f32 %v844, -0.001358992
      %v846 = vadd.f32 %v845, 0.041655596
      %v847 = vmul.f32 %v844, %v846
      %v848 = vadd.f32 %v847, -0.4999988
      %v849 = vmul.f32 %v844, %v848
      %v850 = vadd.f32 1.0, %v849
      %v851 = vmul.f32 %v842, %v842
      %v852 = vmul.f32 %v851, -0.00019511016
      %v853 = vadd.f32 %v852, 0.008332121
      %v854 = vmul.f32 %v851, %v853
      %v855 = vadd.f32 %v854, -0.16666654
      %v856 = vmul.f32 %v851, %v855
      %v857 = vadd.f32 %v856, 1.0
      %v858 = vmul.f32 %v857, %v842
      %vm859 = vweird.f32 %v253
      %v860 = vand.u32 %v843, 3
      %vm861 = vcmp.lt.s32.totalorder %v860, 2
      %vm862 = vcmp.eq.s32.totalorder %v860, 0
      %v863 = vxor.u32 %v858, 2147483648
      %v864 = vsel %vm862, %v850, %v863
      %vm865 = vcmp.eq.s32.totalorder %v860, 2
      %v866 = vxor.u32 %v850, 2147483648
      %v867 = vsel %vm865, %v866, %v858
      %v868 = vsel %vm861, %v864, %v867
      %v869 = vsel %vm859, nan, %v868
      %v870 = vand.u32 2147483647, %v250
      %vm871 = vcmp.le.f32.partialorder %v870, 0.7853982
      %vm872 = vcmp.lt.s32.totalorder %v250, 0
      %v873 = vand.u32 %v250, 2139095040
      %v874 = vshrl.u32 %v873, 23
      %v875 = vsub.s32 %v874, 127
      %v876 = vand.u32 2147483647, %v250
      %v877 = vand.u32 %v876, 8388607
      %v878 = vor.u32 %v877, 8388608
      %v879 = vsub.s32 0, %v878
      %v880 = vadd.s32 %v875, 1
      %vm881 = vcmp.gt.s32.totalorder %v880, 0
      %v882 = vsel %vm881, %v880, 0
      %v883 = vshrl.u32 %v882, 5
      %v884 = vand.u32 %v882, 31
      %v885 = vsub.s32 32, %v884
      %v886 = vshrl.u32 683565275, %v885
      %v887 = vshll.u32 683565275, %v884
      %v888 = vshrl.u32 2475754826, %v885
      %v889 = vor.u32 %v887, %v888
      %v890 = vshll.u32 2475754826, %v884
      %v891 = vshrl.u32 2131351028, %v885
      %v892 = vor.u32 %v890, %v891
      %v893 = vshll.u32 2131351028, %v884
      %v894 = vshrl.u32 2102212464, %v885
      %v895 = vor.u32 %v893, %v894
      %v896 = vshll.u32 2102212464, %v884
      %v897 = vshrl.u32 920167782, %v885
      %v898 = vor.u32 %v896, %v897
      %v899 = vshll.u32 920167782, %v884
      %v900 = vshrl.u32 1326507024, %v885
      %v901 = vor.u32 %v899, %v900
      %vm902 = vcmp.lt.s32.totalorder %v883, 1
      %vm903 = vcmp.lt.s32.totalorder %v883, 2
      %vm904 = vcmp.lt.s32.totalorder %v883, 3
      %vm905 = vcmp.lt.s32.totalorder %v883, 4
      %v906 = vsel %vm902, %v886, %v889
      %v907 = vsel %vm905, %v895, 2102212464
      %v908 = vsel %vm904, %v892, %v907
      %v909 = vsel %vm903, %v906, %v908
      %v910 = vsel %vm902, %v889, %v892
      %v911 = vsel %vm905, %v898, 920167782
      %v912 = vsel %vm904, %v895, %v911
      %v913 = vsel %vm903, %v910, %v912
      %v914 = vsel %vm902, %v892, %v895
      %v915 = vsel %vm905, %v901, 1326507024
      %v916 = vsel %vm904, %v898, %v915
      %v917 = vsel %vm903, %v914, %v916
      %v918 = vshll.u32 %v878, 8
      %v919 = vand.u32 %v918, 65535
      %v920 = vshrl.u32 %v918, 16
      %v921 = vand.u32 %v917, 65535
      %v922 = vshrl.u32 %v917, 16
      %v923 = vmul.u32 %v919, %v921
      %v924 = vmul.u32 %v919, %v922
      %v925 = vmul.u32 %v920, %v921
      %v926 = vmul.u32 %v920, %v922
      %v927 = vshll.u32 %v924, 16
      %v928 = vshrl.u32 %v924, 16
      %v929 = vshll.u32 %v925, 16
      %v930 = vshrl.u32 %v925, 16
      %vm931 = vc.u32 %v923, %v927
      %v932 = vsel %vm931, 1, 0
      %v933 = vadd.s32 %v923, %v927
      %v934 = vadd.s32 %v926, %v932
      %vm935 = vc.u32 %v933, %v929
      %v936 = vsel %vm935, 1, 0
      %v937 = vadd.s32 %v933, %v929
      %v938 = vadd.s32 %v934, %v936
      %v939 = vadd.s32 %v938, %v928
      %v940 = vadd.s32 %v939, %v930
      %v941 = vand.u32 %v918, 65535
      %v942 = vshrl.u32 %v918, 16
      %v943 = vand.u32 %v913, 65535
      %v944 = vshrl.u32 %v913, 16
      %v945 = vmul.u32 %v941, %v943
      %v946 = vmul.u32 %v941, %v944
      %v947 = vmul.u32 %v942, %v943
      %v948 = vmul.u32 %v942, %v944
      %v949 = vshll.u32 %v946, 16
      %v950 = vshrl.u32 %v946, 16
      %v951 = vshll.u32 %v947, 16
      %v952 = vshrl.u32 %v947, 16
      %vm953 = vc.u32 %v945, %v949
      %v954 = vsel %vm953, 1, 0
      %v955 = vadd.s32 %v945, %v949
      %v956 = vadd.s32 %v948, %v954
      %vm957 = vc.u32 %v955, %v951
      %v958 = vsel %vm957, 1, 0
      %v959 = vadd.s32 %v955, %v951
      %v960 = vadd.s32 %v956, %v958
      %v961 = vadd.s32 %v960, %v950
      %v962 = vadd.s32 %v961, %v952
      %v963 = vmul.u32 %v918, %v909
      %v964 = vadd.s32 %v940, %v959
      %vm965 = vc.u32 %v940, %v959
      %v966 = vadd.s32 %v962, 1
      %v967 = vsel %vm965, %v966, %v962
      %v968 = vadd.s32 %v963, %v967
      %v969 = vadd.s32 %v968, 536870912
      %v970 = vshrl.u32 %v969, 30
      %v971 = vshll.u32 %v970, 30
      %v972 = vsub.s32 %v968, %v971
      %vm973 = vcmp.lt.s32.totalorder %v972, 0
      %v974 = vsub.s32 0, %v972
      %v975 = vsel %vm973, %v974, %v972
      %v976 = vclz %v975
      %v977 = vsub.s32 %v976, 2
      %vm978 = vcmp.gt.s32.totalorder 0, %v977
      %v979 = vsel %vm978, 0, %v977
      %v980 = vsub.s32 32, %v979
      %v981 = vshll.u32 %v972, %v979
      %v982 = vshrl.u32 %v964, %v980
      %v983 = vor.u32 %v981, %v982
      %v984 = vsub.s32 4294967266, %v979
      %v985 = vadd.s32 %v984, 127
      %v986 = vshll.u32 %v985, 23
      %v987 = vor.u32 4788187, %v986
      %v988 = vand.u32 2147483647, %v987
      %v990 = vcvt.s32.f32 %v983
      %v991 = vmul.f32 %v990, %v988
      %v992 = vxor.u32 %v991, 2147483648
      %v993 = vsel %vm872, %v992, %v991
      %v994 = vsub.s32 4, %v970
      %v995 = vsel %vm872, %v994, %v970
      %v996 = vsel %vm871, %v250, %v993
      %v997 = vsel %vm871, 0, %v995
      %v998 = vmul.f32 %v996, %v996
      %v999 = vmul.f32 %v998, -0.001358992
      %v1000 = vadd.f32 %v999, 0.041655596
      %v1001 = vmul.f32 %v998, %v1000
      %v1002 = vadd.f32 %v1001, -0.4999988
      %v1003 = vmul.f32 %v998, %v1002
      %v1004 = vadd.f32 1.0, %v1003
      %v1005 = vmul.f32 %v996, %v996
      %v1006 = vmul.f32 %v1005, -0.00019511016
      %v1007 = vadd.f32 %v1006, 0.008332121
      %v1008 = vmul.f32 %v1005, %v1007
      %v1009 = vadd.f32 %v1008, -0.16666654
      %v1010 = vmul.f32 %v1005, %v1009
      %v1011 = vadd.f32 %v1010, 1.0
      %v1012 = vmul.f32 %v1011, %v996
      %vm1013 = vweird.f32 %v250
      %v1014 = vadd.s32 %v997, 3
      %v1015 = vand.u32 %v1014, 3
      %vm1016 = vcmp.lt.s32.totalorder %v1015, 2
      %vm1017 = vcmp.eq.s32.totalorder %v1015, 0
      %v1018 = vxor.u32 %v1012, 2147483648
      %v1019 = vsel %vm1017, %v1004, %v1018
      %vm1020 = vcmp.eq.s32.totalorder %v1015, 2
      %v1021 = vxor.u32 %v1004, 2147483648
      %v1022 = vsel %vm1020, %v1021, %v1012
      %v1023 = vsel %vm1016, %v1019, %v1022
      %v1024 = vsel %vm1013, nan, %v1023
      %v1025 = vand.u32 2147483647, %v251
      %vm1026 = vcmp.le.f32.partialorder %v1025, 0.7853982
      %vm1027 = vcmp.lt.s32.totalorder %v251, 0
      %v1028 = vand.u32 %v251, 2139095040
      %v1029 = vshrl.u32 %v1028, 23
      %v1030 = vsub.s32 %v1029, 127
      %v1031 = vand.u32 2147483647, %v251
      %v1032 = vand.u32 %v1031, 8388607
      %v1033 = vor.u32 %v1032, 8388608
      %v1034 = vsub.s32 0, %v1033
      %v1035 = vadd.s32 %v1030, 1
      %vm1036 = vcmp.gt.s32.totalorder %v1035, 0
      %v1037 = vsel %vm1036, %v1035, 0
      %v1038 = vshrl.u32 %v1037, 5
      %v1039 = vand.u32 %v1037, 31
      %v1040 = vsub.s32 32, %v1039
      %v1041 = vshrl.u32 683565275, %v1040
      %v1042 = vshll.u32 683565275, %v1039
      %v1043 = vshrl.u32 2475754826, %v1040
      %v1044 = vor.u32 %v1042, %v1043
      %v1045 = vshll.u32 2475754826, %v1039
      %v1046 = vshrl.u32 2131351028, %v1040
      %v1047 = vor.u32 %v1045, %v1046
      %v1048 = vshll.u32 2131351028, %v1039
      %v1049 = vshrl.u32 2102212464, %v1040
      %v1050 = vor.u32 %v1048, %v1049
      %v1051 = vshll.u32 2102212464, %v1039
      %v1052 = vshrl.u32 920167782, %v1040
      %v1053 = vor.u32 %v1051, %v1052
      %v1054 = vshll.u32 920167782, %v1039
      %v1055 = vshrl.u32 1326507024, %v1040
      %v1056 = vor.u32 %v1054, %v1055
      %vm1057 = vcmp.lt.s32.totalorder %v1038, 1
      %vm1058 = vcmp.lt.s32.totalorder %v1038, 2
      %vm1059 = vcmp.lt.s32.totalorder %v1038, 3
      %vm1060 = vcmp.lt.s32.totalorder %v1038, 4
      %v1061 = vsel %vm1057, %v1041, %v1044
      %v1062 = vsel %vm1060, %v1050, 2102212464
      %v1063 = vsel %vm1059, %v1047, %v1062
      %v1064 = vsel %vm1058, %v1061, %v1063
      %v1065 = vsel %vm1057, %v1044, %v1047
      %v1066 = vsel %vm1060, %v1053, 920167782
      %v1067 = vsel %vm1059, %v1050, %v1066
      %v1068 = vsel %vm1058, %v1065, %v1067
      %v1069 = vsel %vm1057, %v1047, %v1050
      %v1070 = vsel %vm1060, %v1056, 1326507024
      %v1071 = vsel %vm1059, %v1053, %v1070
      %v1072 = vsel %vm1058, %v1069, %v1071
      %v1073 = vshll.u32 %v1033, 8
      %v1074 = vand.u32 %v1073, 65535
      %v1075 = vshrl.u32 %v1073, 16
      %v1076 = vand.u32 %v1072, 65535
      %v1077 = vshrl.u32 %v1072, 16
      %v1078 = vmul.u32 %v1074, %v1076
      %v1079 = vmul.u32 %v1074, %v1077
      %v1080 = vmul.u32 %v1075, %v1076
      %v1081 = vmul.u32 %v1075, %v1077
      %v1082 = vshll.u32 %v1079, 16
      %v1083 = vshrl.u32 %v1079, 16
      %v1084 = vshll.u32 %v1080, 16
      %v1085 = vshrl.u32 %v1080, 16
      %vm1086 = vc.u32 %v1078, %v1082
      %v1087 = vsel %vm1086, 1, 0
      %v1088 = vadd.s32 %v1078, %v1082
      %v1089 = vadd.s32 %v1081, %v1087
      %vm1090 = vc.u32 %v1088, %v1084
      %v1091 = vsel %vm1090, 1, 0
      %v1092 = vadd.s32 %v1088, %v1084
      %v1093 = vadd.s32 %v1089, %v1091
      %v1094 = vadd.s32 %v1093, %v1083
      %v1095 = vadd.s32 %v1094, %v1085
      %v1096 = vand.u32 %v1073, 65535
      %v1097 = vshrl.u32 %v1073, 16
      %v1098 = vand.u32 %v1068, 65535
      %v1099 = vshrl.u32 %v1068, 16
      %v1100 = vmul.u32 %v1096, %v1098
      %v1101 = vmul.u32 %v1096, %v1099
      %v1102 = vmul.u32 %v1097, %v1098
      %v1103 = vmul.u32 %v1097, %v1099
      %v1104 = vshll.u32 %v1101, 16
      %v1105 = vshrl.u32 %v1101, 16
      %v1106 = vshll.u32 %v1102, 16
      %v1107 = vshrl.u32 %v1102, 16
      %vm1108 = vc.u32 %v1100, %v1104
      %v1109 = vsel %vm1108, 1, 0
      %v1110 = vadd.s32 %v1100, %v1104
      %v1111 = vadd.s32 %v1103, %v1109
      %vm1112 = vc.u32 %v1110, %v1106
      %v1113 = vsel %vm1112, 1, 0
      %v1114 = vadd.s32 %v1110, %v1106
      %v1115 = vadd.s32 %v1111, %v1113
      %v1116 = vadd.s32 %v1115, %v1105
      %v1117 = vadd.s32 %v1116, %v1107
      %v1118 = vmul.u32 %v1073, %v1064
      %v1119 = vadd.s32 %v1095, %v1114
      %vm1120 = vc.u32 %v1095, %v1114
      %v1121 = vadd.s32 %v1117, 1
      %v1122 = vsel %vm1120, %v1121, %v1117
      %v1123 = vadd.s32 %v1118, %v1122
      %v1124 = vadd.s32 %v1123, 536870912
      %v1125 = vshrl.u32 %v1124, 30
      %v1126 = vshll.u32 %v1125, 30
      %v1127 = vsub.s32 %v1123, %v1126
      %vm1128 = vcmp.lt.s32.totalorder %v1127, 0
      %v1129 = vsub.s32 0, %v1127
      %v1130 = vsel %vm1128, %v1129, %v1127
      %v1131 = vclz %v1130
      %v1132 = vsub.s32 %v1131, 2
      %vm1133 = vcmp.gt.s32.totalorder 0, %v1132
      %v1134 = vsel %vm1133, 0, %v1132
      %v1135 = vsub.s32 32, %v1134
      %v1136 = vshll.u32 %v1127, %v1134
      %v1137 = vshrl.u32 %v1119, %v1135
      %v1138 = vor.u32 %v1136, %v1137
      %v1139 = vsub.s32 4294967266, %v1134
      %v1140 = vadd.s32 %v1139, 127
      %v1141 = vshll.u32 %v1140, 23
      %v1142 = vor.u32 4788187, %v1141
      %v1143 = vand.u32 2147483647, %v1142
      %v1145 = vcvt.s32.f32 %v1138
      %v1146 = vmul.f32 %v1145, %v1143
      %v1147 = vxor.u32 %v1146, 2147483648
      %v1148 = vsel %vm1027, %v1147, %v1146
      %v1149 = vsub.s32 4, %v1125
      %v1150 = vsel %vm1027, %v1149, %v1125
      %v1151 = vsel %vm1026, %v251, %v1148
      %v1152 = vsel %vm1026, 0, %v1150
      %v1153 = vmul.f32 %v1151, %v1151
      %v1154 = vmul.f32 %v1153, -0.001358992
      %v1155 = vadd.f32 %v1154, 0.041655596
      %v1156 = vmul.f32 %v1153, %v1155
      %v1157 = vadd.f32 %v1156, -0.4999988
      %v1158 = vmul.f32 %v1153, %v1157
      %v1159 = vadd.f32 1.0, %v1158
      %v1160 = vmul.f32 %v1151, %v1151
      %v1161 = vmul.f32 %v1160, -0.00019511016
      %v1162 = vadd.f32 %v1161, 0.008332121
      %v1163 = vmul.f32 %v1160, %v1162
      %v1164 = vadd.f32 %v1163, -0.16666654
      %v1165 = vmul.f32 %v1160, %v1164
      %v1166 = vadd.f32 %v1165, 1.0
      %v1167 = vmul.f32 %v1166, %v1151
      %vm1168 = vweird.f32 %v251
      %v1169 = vadd.s32 %v1152, 3
      %v1170 = vand.u32 %v1169, 3
      %vm1171 = vcmp.lt.s32.totalorder %v1170, 2
      %vm1172 = vcmp.eq.s32.totalorder %v1170, 0
      %v1173 = vxor.u32 %v1167, 2147483648
      %v1174 = vsel %vm1172, %v1159, %v1173
      %vm1175 = vcmp.eq.s32.totalorder %v1170, 2
      %v1176 = vxor.u32 %v1159, 2147483648
      %v1177 = vsel %vm1175, %v1176, %v1167
      %v1178 = vsel %vm1171, %v1174, %v1177
      %v1179 = vsel %vm1168, nan, %v1178
      %v1180 = vand.u32 2147483647, %v252
      %vm1181 = vcmp.le.f32.partialorder %v1180, 0.7853982
      %vm1182 = vcmp.lt.s32.totalorder %v252, 0
      %v1183 = vand.u32 %v252, 2139095040
      %v1184 = vshrl.u32 %v1183, 23
      %v1185 = vsub.s32 %v1184, 127
      %v1186 = vand.u32 2147483647, %v252
      %v1187 = vand.u32 %v1186, 8388607
      %v1188 = vor.u32 %v1187, 8388608
      %v1189 = vsub.s32 0, %v1188
      %v1190 = vadd.s32 %v1185, 1
      %vm1191 = vcmp.gt.s32.totalorder %v1190, 0
      %v1192 = vsel %vm1191, %v1190, 0
      %v1193 = vshrl.u32 %v1192, 5
      %v1194 = vand.u32 %v1192, 31
      %v1195 = vsub.s32 32, %v1194
      %v1196 = vshrl.u32 683565275, %v1195
      %v1197 = vshll.u32 683565275, %v1194
      %v1198 = vshrl.u32 2475754826, %v1195
      %v1199 = vor.u32 %v1197, %v1198
      %v1200 = vshll.u32 2475754826, %v1194
      %v1201 = vshrl.u32 2131351028, %v1195
      %v1202 = vor.u32 %v1200, %v1201
      %v1203 = vshll.u32 2131351028, %v1194
      %v1204 = vshrl.u32 2102212464, %v1195
      %v1205 = vor.u32 %v1203, %v1204
      %v1206 = vshll.u32 2102212464, %v1194
      %v1207 = vshrl.u32 920167782, %v1195
      %v1208 = vor.u32 %v1206, %v1207
      %v1209 = vshll.u32 920167782, %v1194
      %v1210 = vshrl.u32 1326507024, %v1195
      %v1211 = vor.u32 %v1209, %v1210
      %vm1212 = vcmp.lt.s32.totalorder %v1193, 1
      %vm1213 = vcmp.lt.s32.totalorder %v1193, 2
      %vm1214 = vcmp.lt.s32.totalorder %v1193, 3
      %vm1215 = vcmp.lt.s32.totalorder %v1193, 4
      %v1216 = vsel %vm1212, %v1196, %v1199
      %v1217 = vsel %vm1215, %v1205, 2102212464
      %v1218 = vsel %vm1214, %v1202, %v1217
      %v1219 = vsel %vm1213, %v1216, %v1218
      %v1220 = vsel %vm1212, %v1199, %v1202
      %v1221 = vsel %vm1215, %v1208, 920167782
      %v1222 = vsel %vm1214, %v1205, %v1221
      %v1223 = vsel %vm1213, %v1220, %v1222
      %v1224 = vsel %vm1212, %v1202, %v1205
      %v1225 = vsel %vm1215, %v1211, 1326507024
      %v1226 = vsel %vm1214, %v1208, %v1225
      %v1227 = vsel %vm1213, %v1224, %v1226
      %v1228 = vshll.u32 %v1188, 8
      %v1229 = vand.u32 %v1228, 65535
      %v1230 = vshrl.u32 %v1228, 16
      %v1231 = vand.u32 %v1227, 65535
      %v1232 = vshrl.u32 %v1227, 16
      %v1233 = vmul.u32 %v1229, %v1231
      %v1234 = vmul.u32 %v1229, %v1232
      %v1235 = vmul.u32 %v1230, %v1231
      %v1236 = vmul.u32 %v1230, %v1232
      %v1237 = vshll.u32 %v1234, 16
      %v1238 = vshrl.u32 %v1234, 16
      %v1239 = vshll.u32 %v1235, 16
      %v1240 = vshrl.u32 %v1235, 16
      %vm1241 = vc.u32 %v1233, %v1237
      %v1242 = vsel %vm1241, 1, 0
      %v1243 = vadd.s32 %v1233, %v1237
      %v1244 = vadd.s32 %v1236, %v1242
      %vm1245 = vc.u32 %v1243, %v1239
      %v1246 = vsel %vm1245, 1, 0
      %v1247 = vadd.s32 %v1243, %v1239
      %v1248 = vadd.s32 %v1244, %v1246
      %v1249 = vadd.s32 %v1248, %v1238
      %v1250 = vadd.s32 %v1249, %v1240
      %v1251 = vand.u32 %v1228, 65535
      %v1252 = vshrl.u32 %v1228, 16
      %v1253 = vand.u32 %v1223, 65535
      %v1254 = vshrl.u32 %v1223, 16
      %v1255 = vmul.u32 %v1251, %v1253
      %v1256 = vmul.u32 %v1251, %v1254
      %v1257 = vmul.u32 %v1252, %v1253
      %v1258 = vmul.u32 %v1252, %v1254
      %v1259 = vshll.u32 %v1256, 16
      %v1260 = vshrl.u32 %v1256, 16
      %v1261 = vshll.u32 %v1257, 16
      %v1262 = vshrl.u32 %v1257, 16
      %vm1263 = vc.u32 %v1255, %v1259
      %v1264 = vsel %vm1263, 1, 0
      %v1265 = vadd.s32 %v1255, %v1259
      %v1266 = vadd.s32 %v1258, %v1264
      %vm1267 = vc.u32 %v1265, %v1261
      %v1268 = vsel %vm1267, 1, 0
      %v1269 = vadd.s32 %v1265, %v1261
      %v1270 = vadd.s32 %v1266, %v1268
      %v1271 = vadd.s32 %v1270, %v1260
      %v1272 = vadd.s32 %v1271, %v1262
      %v1273 = vmul.u32 %v1228, %v1219
      %v1274 = vadd.s32 %v1250, %v1269
      %vm1275 = vc.u32 %v1250, %v1269
      %v1276 = vadd.s32 %v1272, 1
      %v1277 = vsel %vm1275, %v1276, %v1272
      %v1278 = vadd.s32 %v1273, %v1277
      %v1279 = vadd.s32 %v1278, 536870912
      %v1280 = vshrl.u32 %v1279, 30
      %v1281 = vshll.u32 %v1280, 30
      %v1282 = vsub.s32 %v1278, %v1281
      %vm1283 = vcmp.lt.s32.totalorder %v1282, 0
      %v1284 = vsub.s32 0, %v1282
      %v1285 = vsel %vm1283, %v1284, %v1282
      %v1286 = vclz %v1285
      %v1287 = vsub.s32 %v1286, 2
      %vm1288 = vcmp.gt.s32.totalorder 0, %v1287
      %v1289 = vsel %vm1288, 0, %v1287
      %v1290 = vsub.s32 32, %v1289
      %v1291 = vshll.u32 %v1282, %v1289
      %v1292 = vshrl.u32 %v1274, %v1290
      %v1293 = vor.u32 %v1291, %v1292
      %v1294 = vsub.s32 4294967266, %v1289
      %v1295 = vadd.s32 %v1294, 127
      %v1296 = vshll.u32 %v1295, 23
      %v1297 = vor.u32 4788187, %v1296
      %v1298 = vand.u32 2147483647, %v1297
      %v1300 = vcvt.s32.f32 %v1293
      %v1301 = vmul.f32 %v1300, %v1298
      %v1302 = vxor.u32 %v1301, 2147483648
      %v1303 = vsel %vm1182, %v1302, %v1301
      %v1304 = vsub.s32 4, %v1280
      %v1305 = vsel %vm1182, %v1304, %v1280
      %v1306 = vsel %vm1181, %v252, %v1303
      %v1307 = vsel %vm1181, 0, %v1305
      %v1308 = vmul.f32 %v1306, %v1306
      %v1309 = vmul.f32 %v1308, -0.001358992
      %v1310 = vadd.f32 %v1309, 0.041655596
      %v1311 = vmul.f32 %v1308, %v1310
      %v1312 = vadd.f32 %v1311, -0.4999988
      %v1313 = vmul.f32 %v1308, %v1312
      %v1314 = vadd.f32 1.0, %v1313
      %v1315 = vmul.f32 %v1306, %v1306
      %v1316 = vmul.f32 %v1315, -0.00019511016
      %v1317 = vadd.f32 %v1316, 0.008332121
      %v1318 = vmul.f32 %v1315, %v1317
      %v1319 = vadd.f32 %v1318, -0.16666654
      %v1320 = vmul.f32 %v1315, %v1319
      %v1321 = vadd.f32 %v1320, 1.0
      %v1322 = vmul.f32 %v1321, %v1306
      %vm1323 = vweird.f32 %v252
      %v1324 = vadd.s32 %v1307, 3
      %v1325 = vand.u32 %v1324, 3
      %vm1326 = vcmp.lt.s32.totalorder %v1325, 2
      %vm1327 = vcmp.eq.s32.totalorder %v1325, 0
      %v1328 = vxor.u32 %v1322, 2147483648
      %v1329 = vsel %vm1327, %v1314, %v1328
      %vm1330 = vcmp.eq.s32.totalorder %v1325, 2
      %v1331 = vxor.u32 %v1314, 2147483648
      %v1332 = vsel %vm1330, %v1331, %v1322
      %v1333 = vsel %vm1326, %v1329, %v1332
      %v1334 = vsel %vm1323, nan, %v1333
      %v1335 = vand.u32 2147483647, %v253
      %vm1336 = vcmp.le.f32.partialorder %v1335, 0.7853982
      %vm1337 = vcmp.lt.s32.totalorder %v253, 0
      %v1338 = vand.u32 %v253, 2139095040
      %v1339 = vshrl.u32 %v1338, 23
      %v1340 = vsub.s32 %v1339, 127
      %v1341 = vand.u32 2147483647, %v253
      %v1342 = vand.u32 %v1341, 8388607
      %v1343 = vor.u32 %v1342, 8388608
      %v1344 = vsub.s32 0, %v1343
      %v1345 = vadd.s32 %v1340, 1
      %vm1346 = vcmp.gt.s32.totalorder %v1345, 0
      %v1347 = vsel %vm1346, %v1345, 0
      %v1348 = vshrl.u32 %v1347, 5
      %v1349 = vand.u32 %v1347, 31
      %v1350 = vsub.s32 32, %v1349
      %v1351 = vshrl.u32 683565275, %v1350
      %v1352 = vshll.u32 683565275, %v1349
      %v1353 = vshrl.u32 2475754826, %v1350
      %v1354 = vor.u32 %v1352, %v1353
      %v1355 = vshll.u32 2475754826, %v1349
      %v1356 = vshrl.u32 2131351028, %v1350
      %v1357 = vor.u32 %v1355, %v1356
      %v1358 = vshll.u32 2131351028, %v1349
      %v1359 = vshrl.u32 2102212464, %v1350
      %v1360 = vor.u32 %v1358, %v1359
      %v1361 = vshll.u32 2102212464, %v1349
      %v1362 = vshrl.u32 920167782, %v1350
      %v1363 = vor.u32 %v1361, %v1362
      %v1364 = vshll.u32 920167782, %v1349
      %v1365 = vshrl.u32 1326507024, %v1350
      %v1366 = vor.u32 %v1364, %v1365
      %vm1367 = vcmp.lt.s32.totalorder %v1348, 1
      %vm1368 = vcmp.lt.s32.totalorder %v1348, 2
      %vm1369 = vcmp.lt.s32.totalorder %v1348, 3
      %vm1370 = vcmp.lt.s32.totalorder %v1348, 4
      %v1371 = vsel %vm1367, %v1351, %v1354
      %v1372 = vsel %vm1370, %v1360, 2102212464
      %v1373 = vsel %vm1369, %v1357, %v1372
      %v1374 = vsel %vm1368, %v1371, %v1373
      %v1375 = vsel %vm1367, %v1354, %v1357
      %v1376 = vsel %vm1370, %v1363, 920167782
      %v1377 = vsel %vm1369, %v1360, %v1376
      %v1378 = vsel %vm1368, %v1375, %v1377
      %v1379 = vsel %vm1367, %v1357, %v1360
      %v1380 = vsel %vm1370, %v1366, 1326507024
      %v1381 = vsel %vm1369, %v1363, %v1380
      %v1382 = vsel %vm1368, %v1379, %v1381
      %v1383 = vshll.u32 %v1343, 8
      %v1384 = vand.u32 %v1383, 65535
      %v1385 = vshrl.u32 %v1383, 16
      %v1386 = vand.u32 %v1382, 65535
      %v1387 = vshrl.u32 %v1382, 16
      %v1388 = vmul.u32 %v1384, %v1386
      %v1389 = vmul.u32 %v1384, %v1387
      %v1390 = vmul.u32 %v1385, %v1386
      %v1391 = vmul.u32 %v1385, %v1387
      %v1392 = vshll.u32 %v1389, 16
      %v1393 = vshrl.u32 %v1389, 16
      %v1394 = vshll.u32 %v1390, 16
      %v1395 = vshrl.u32 %v1390, 16
      %vm1396 = vc.u32 %v1388, %v1392
      %v1397 = vsel %vm1396, 1, 0
      %v1398 = vadd.s32 %v1388, %v1392
      %v1399 = vadd.s32 %v1391, %v1397
      %vm1400 = vc.u32 %v1398, %v1394
      %v1401 = vsel %vm1400, 1, 0
      %v1402 = vadd.s32 %v1398, %v1394
      %v1403 = vadd.s32 %v1399, %v1401
      %v1404 = vadd.s32 %v1403, %v1393
      %v1405 = vadd.s32 %v1404, %v1395
      %v1406 = vand.u32 %v1383, 65535
      %v1407 = vshrl.u32 %v1383, 16
      %v1408 = vand.u32 %v1378, 65535
      %v1409 = vshrl.u32 %v1378, 16
      %v1410 = vmul.u32 %v1406, %v1408
      %v1411 = vmul.u32 %v1406, %v1409
      %v1412 = vmul.u32 %v1407, %v1408
      %v1413 = vmul.u32 %v1407, %v1409
      %v1414 = vshll.u32 %v1411, 16
      %v1415 = vshrl.u32 %v1411, 16
      %v1416 = vshll.u32 %v1412, 16
      %v1417 = vshrl.u32 %v1412, 16
      %vm1418 = vc.u32 %v1410, %v1414
      %v1419 = vsel %vm1418, 1, 0
      %v1420 = vadd.s32 %v1410, %v1414
      %v1421 = vadd.s32 %v1413, %v1419
      %vm1422 = vc.u32 %v1420, %v1416
      %v1423 = vsel %vm1422, 1, 0
      %v1424 = vadd.s32 %v1420, %v1416
      %v1425 = vadd.s32 %v1421, %v1423
      %v1426 = vadd.s32 %v1425, %v1415
      %v1427 = vadd.s32 %v1426, %v1417
      %v1428 = vmul.u32 %v1383, %v1374
      %v1429 = vadd.s32 %v1405, %v1424
      %vm1430 = vc.u32 %v1405, %v1424
      %v1431 = vadd.s32 %v1427, 1
      %v1432 = vsel %vm1430, %v1431, %v1427
      %v1433 = vadd.s32 %v1428, %v1432
      %v1434 = vadd.s32 %v1433, 536870912
      %v1435 = vshrl.u32 %v1434, 30
      %v1436 = vshll.u32 %v1435, 30
      %v1437 = vsub.s32 %v1433, %v1436
      %vm1438 = vcmp.lt.s32.totalorder %v1437, 0
      %v1439 = vsub.s32 0, %v1437
      %v1440 = vsel %vm1438, %v1439, %v1437
      %v1441 = vclz %v1440
      %v1442 = vsub.s32 %v1441, 2
      %vm1443 = vcmp.gt.s32.totalorder 0, %v1442
      %v1444 = vsel %vm1443, 0, %v1442
      %v1445 = vsub.s32 32, %v1444
      %v1446 = vshll.u32 %v1437, %v1444
      %v1447 = vshrl.u32 %v1429, %v1445
      %v1448 = vor.u32 %v1446, %v1447
      %v1449 = vsub.s32 4294967266, %v1444
      %v1450 = vadd.s32 %v1449, 127
      %v1451 = vshll.u32 %v1450, 23
      %v1452 = vor.u32 4788187, %v1451
      %v1453 = vand.u32 2147483647, %v1452
      %v1455 = vcvt.s32.f32 %v1448
      %v1456 = vmul.f32 %v1455, %v1453
      %v1457 = vxor.u32 %v1456, 2147483648
      %v1458 = vsel %vm1337, %v1457, %v1456
      %v1459 = vsub.s32 4, %v1435
      %v1460 = vsel %vm1337, %v1459, %v1435
      %v1461 = vsel %vm1336, %v253, %v1458
      %v1462 = vsel %vm1336, 0, %v1460
      %v1463 = vmul.f32 %v1461, %v1461
      %v1464 = vmul.f32 %v1463, -0.001358992
      %v1465 = vadd.f32 %v1464, 0.041655596
      %v1466 = vmul.f32 %v1463, %v1465
      %v1467 = vadd.f32 %v1466, -0.4999988
      %v1468 = vmul.f32 %v1463, %v1467
      %v1469 = vadd.f32 1.0, %v1468
      %v1470 = vmul.f32 %v1461, %v1461
      %v1471 = vmul.f32 %v1470, -0.00019511016
      %v1472 = vadd.f32 %v1471, 0.008332121
      %v1473 = vmul.f32 %v1470, %v1472
      %v1474 = vadd.f32 %v1473, -0.16666654
      %v1475 = vmul.f32 %v1470, %v1474
      %v1476 = vadd.f32 %v1475, 1.0
      %v1477 = vmul.f32 %v1476, %v1461
      %vm1478 = vweird.f32 %v253
      %v1479 = vadd.s32 %v1462, 3
      %v1480 = vand.u32 %v1479, 3
      %vm1481 = vcmp.lt.s32.totalorder %v1480, 2
      %vm1482 = vcmp.eq.s32.totalorder %v1480, 0
      %v1483 = vxor.u32 %v1477, 2147483648
      %v1484 = vsel %vm1482, %v1469, %v1483
      %vm1485 = vcmp.eq.s32.totalorder %v1480, 2
      %v1486 = vxor.u32 %v1469, 2147483648
      %v1487 = vsel %vm1485, %v1486, %v1477
      %v1488 = vsel %vm1481, %v1484, %v1487
      %v1489 = vsel %vm1478, nan, %v1488
      %1490 = vxpose.xlu0.b32.start [1/16] %v407, 128
      %1491 = vxpose.xlu0.b32.cont [2/16] %v715, 128
      %1492 = vxpose.xlu0.b32.cont [3/16] 0.0, 128
      %1493 = vxpose.xlu0.b32.cont [4/16] 0.0, 128
      %1494 = vxpose.xlu0.b32.cont [5/16] 0.0, 128
      %1495 = vxpose.xlu0.b32.cont [6/16] 0.0, 128
      %1496 = vxpose.xlu0.b32.cont [7/16] 0.0, 128
      %1497 = vxpose.xlu0.b32.cont [8/16] 0.0, 128
      %1498 = vxpose.xlu0.b32.cont [9/16] 0.0, 128
      %1499 = vxpose.xlu0.b32.cont [10/16] 0.0, 128
      %1500 = vxpose.xlu0.b32.cont [11/16] 0.0, 128
      %1501 = vxpose.xlu0.b32.cont [12/16] 0.0, 128
      %1502 = vxpose.xlu0.b32.cont [13/16] 0.0, 128
      %1503 = vxpose.xlu0.b32.cont [14/16] 0.0, 128
      %1504 = vxpose.xlu0.b32.cont [15/16] 0.0, 128
      %1505 = vxpose.xlu0.b32.end [16/16] 0.0, 128
      %v1506 = vpop.trf.xlu0
      %v1507 = vpop.trf.xlu0
      %v1508 = vpop.trf.xlu0
      %v1509 = vpop.trf.xlu0
      %v1510 = vpop.trf.xlu0
      %v1511 = vpop.trf.xlu0
      %v1512 = vpop.trf.xlu0
      %v1513 = vpop.trf.xlu0
      %v1514 = vpop.trf.xlu0
      %v1515 = vpop.trf.xlu0
      %v1516 = vpop.trf.xlu0
      %v1517 = vpop.trf.xlu0
      %v1518 = vpop.trf.xlu0
      %v1519 = vpop.trf.xlu0
      %v1520 = vpop.trf.xlu0
      %v1521 = vpop.trf.xlu0
      %1522 = vxpose.xlu0.b32.start [1/16] %v561, 128
      %1523 = vxpose.xlu0.b32.cont [2/16] %v869, 128
      %1524 = vxpose.xlu0.b32.cont [3/16] 0.0, 128
      %1525 = vxpose.xlu0.b32.cont [4/16] 0.0, 128
      %1526 = vxpose.xlu0.b32.cont [5/16] 0.0, 128
      %1527 = vxpose.xlu0.b32.cont [6/16] 0.0, 128
      %1528 = vxpose.xlu0.b32.cont [7/16] 0.0, 128
      %1529 = vxpose.xlu0.b32.cont [8/16] 0.0, 128
      %1530 = vxpose.xlu0.b32.cont [9/16] 0.0, 128
      %1531 = vxpose.xlu0.b32.cont [10/16] 0.0, 128
      %1532 = vxpose.xlu0.b32.cont [11/16] 0.0, 128
      %1533 = vxpose.xlu0.b32.cont [12/16] 0.0, 128
      %1534 = vxpose.xlu0.b32.cont [13/16] 0.0, 128
      %1535 = vxpose.xlu0.b32.cont [14/16] 0.0, 128
      %1536 = vxpose.xlu0.b32.cont [15/16] 0.0, 128
      %1537 = vxpose.xlu0.b32.end [16/16] 0.0, 128
      %v1538 = vpop.trf.xlu0
      %v1539 = vpop.trf.xlu0
      %v1540 = vpop.trf.xlu0
      %v1541 = vpop.trf.xlu0
      %v1542 = vpop.trf.xlu0
      %v1543 = vpop.trf.xlu0
      %v1544 = vpop.trf.xlu0
      %v1545 = vpop.trf.xlu0
      %v1546 = vpop.trf.xlu0
      %v1547 = vpop.trf.xlu0
      %v1548 = vpop.trf.xlu0
      %v1549 = vpop.trf.xlu0
      %v1550 = vpop.trf.xlu0
      %v1551 = vpop.trf.xlu0
      %v1552 = vpop.trf.xlu0
      %v1553 = vpop.trf.xlu0
      %1554 = vxpose.xlu0.b32.start [1/16] %v1024, 128
      %1555 = vxpose.xlu0.b32.cont [2/16] %v1334, 128
      %1556 = vxpose.xlu0.b32.cont [3/16] 0.0, 128
      %1557 = vxpose.xlu0.b32.cont [4/16] 0.0, 128
      %1558 = vxpose.xlu0.b32.cont [5/16] 0.0, 128
      %1559 = vxpose.xlu0.b32.cont [6/16] 0.0, 128
      %1560 = vxpose.xlu0.b32.cont [7/16] 0.0, 128
      %1561 = vxpose.xlu0.b32.cont [8/16] 0.0, 128
      %1562 = vxpose.xlu0.b32.cont [9/16] 0.0, 128
      %1563 = vxpose.xlu0.b32.cont [10/16] 0.0, 128
      %1564 = vxpose.xlu0.b32.cont [11/16] 0.0, 128
      %1565 = vxpose.xlu0.b32.cont [12/16] 0.0, 128
      %1566 = vxpose.xlu0.b32.cont [13/16] 0.0, 128
      %1567 = vxpose.xlu0.b32.cont [14/16] 0.0, 128
      %1568 = vxpose.xlu0.b32.cont [15/16] 0.0, 128
      %1569 = vxpose.xlu0.b32.end [16/16] 0.0, 128
      %v1570 = vpop.trf.xlu0
      %v1571 = vpop.trf.xlu0
      %v1572 = vpop.trf.xlu0
      %v1573 = vpop.trf.xlu0
      %v1574 = vpop.trf.xlu0
      %v1575 = vpop.trf.xlu0
      %v1576 = vpop.trf.xlu0
      %v1577 = vpop.trf.xlu0
      %v1578 = vpop.trf.xlu0
      %v1579 = vpop.trf.xlu0
      %v1580 = vpop.trf.xlu0
      %v1581 = vpop.trf.xlu0
      %v1582 = vpop.trf.xlu0
      %v1583 = vpop.trf.xlu0
      %v1584 = vpop.trf.xlu0
      %v1585 = vpop.trf.xlu0
      %1586 = vxpose.xlu0.b32.start [1/16] %v1179, 128
      %1587 = vxpose.xlu0.b32.cont [2/16] %v1489, 128
      %1588 = vxpose.xlu0.b32.cont [3/16] 0.0, 128
      %1589 = vxpose.xlu0.b32.cont [4/16] 0.0, 128
      %1590 = vxpose.xlu0.b32.cont [5/16] 0.0, 128
      %1591 = vxpose.xlu0.b32.cont [6/16] 0.0, 128
      %1592 = vxpose.xlu0.b32.cont [7/16] 0.0, 128
      %1593 = vxpose.xlu0.b32.cont [8/16] 0.0, 128
      %1594 = vxpose.xlu0.b32.cont [9/16] 0.0, 128
      %1595 = vxpose.xlu0.b32.cont [10/16] 0.0, 128
      %1596 = vxpose.xlu0.b32.cont [11/16] 0.0, 128
      %1597 = vxpose.xlu0.b32.cont [12/16] 0.0, 128
      %1598 = vxpose.xlu0.b32.cont [13/16] 0.0, 128
      %1599 = vxpose.xlu0.b32.cont [14/16] 0.0, 128
      %1600 = vxpose.xlu0.b32.cont [15/16] 0.0, 128
      %1601 = vxpose.xlu0.b32.end [16/16] 0.0, 128
      %v1602 = vpop.trf.xlu0
      %v1603 = vpop.trf.xlu0
      %v1604 = vpop.trf.xlu0
      %v1605 = vpop.trf.xlu0
      %v1606 = vpop.trf.xlu0
      %v1607 = vpop.trf.xlu0
      %v1608 = vpop.trf.xlu0
      %v1609 = vpop.trf.xlu0
      %v1610 = vpop.trf.xlu0
      %v1611 = vpop.trf.xlu0
      %v1612 = vpop.trf.xlu0
      %v1613 = vpop.trf.xlu0
      %v1614 = vpop.trf.xlu0
      %v1615 = vpop.trf.xlu0
      %v1616 = vpop.trf.xlu0
      %v1617 = vpop.trf.xlu0
      %1650 = vrot.lane.b32.xlu0 %v1506, 16
      %v1651 = vpop.permute.xlu0 %1650
      %1652 = vrot.lane.b32.xlu0 %v1507, 16
      %v1653 = vpop.permute.xlu0 %1652
      %1654 = vrot.lane.b32.xlu0 %v1508, 16
      %v1655 = vpop.permute.xlu0 %1654
      %1656 = vrot.lane.b32.xlu0 %v1509, 16
      %v1657 = vpop.permute.xlu0 %1656
      %1658 = vrot.lane.b32.xlu0 %v1510, 16
      %v1659 = vpop.permute.xlu0 %1658
      %1660 = vrot.lane.b32.xlu0 %v1511, 16
      %v1661 = vpop.permute.xlu0 %1660
      %1662 = vrot.lane.b32.xlu0 %v1512, 16
      %v1663 = vpop.permute.xlu0 %1662
      %1664 = vrot.lane.b32.xlu0 %v1513, 16
      %v1665 = vpop.permute.xlu0 %1664
      %1666 = vrot.lane.b32.xlu0 %v1514, 16
      %v1667 = vpop.permute.xlu0 %1666
      %1668 = vrot.lane.b32.xlu0 %v1515, 16
      %v1669 = vpop.permute.xlu0 %1668
      %1670 = vrot.lane.b32.xlu0 %v1516, 16
      %v1671 = vpop.permute.xlu0 %1670
      %1672 = vrot.lane.b32.xlu0 %v1517, 16
      %v1673 = vpop.permute.xlu0 %1672
      %1674 = vrot.lane.b32.xlu0 %v1518, 16
      %v1675 = vpop.permute.xlu0 %1674
      %1676 = vrot.lane.b32.xlu0 %v1519, 16
      %v1677 = vpop.permute.xlu0 %1676
      %1678 = vrot.lane.b32.xlu0 %v1520, 16
      %v1679 = vpop.permute.xlu0 %1678
      %1680 = vrot.lane.b32.xlu0 %v1521, 16
      %v1681 = vpop.permute.xlu0 %1680
      %1682 = vrot.lane.b32.xlu0 %v1538, 16
      %v1683 = vpop.permute.xlu0 %1682
      %1684 = vrot.lane.b32.xlu0 %v1539, 16
      %v1685 = vpop.permute.xlu0 %1684
      %1686 = vrot.lane.b32.xlu0 %v1540, 16
      %v1687 = vpop.permute.xlu0 %1686
      %1688 = vrot.lane.b32.xlu0 %v1541, 16
      %v1689 = vpop.permute.xlu0 %1688
      %1690 = vrot.lane.b32.xlu0 %v1542, 16
      %v1691 = vpop.permute.xlu0 %1690
      %1692 = vrot.lane.b32.xlu0 %v1543, 16
      %v1693 = vpop.permute.xlu0 %1692
      %1694 = vrot.lane.b32.xlu0 %v1544, 16
      %v1695 = vpop.permute.xlu0 %1694
      %1696 = vrot.lane.b32.xlu0 %v1545, 16
      %v1697 = vpop.permute.xlu0 %1696
      %1698 = vrot.lane.b32.xlu0 %v1546, 16
      %v1699 = vpop.permute.xlu0 %1698
      %1700 = vrot.lane.b32.xlu0 %v1547, 16
      %v1701 = vpop.permute.xlu0 %1700
      %1702 = vrot.lane.b32.xlu0 %v1548, 16
      %v1703 = vpop.permute.xlu0 %1702
      %1704 = vrot.lane.b32.xlu0 %v1549, 16
      %v1705 = vpop.permute.xlu0 %1704
      %1706 = vrot.lane.b32.xlu0 %v1550, 16
      %v1707 = vpop.permute.xlu0 %1706
      %1708 = vrot.lane.b32.xlu0 %v1551, 16
      %v1709 = vpop.permute.xlu0 %1708
      %1710 = vrot.lane.b32.xlu0 %v1552, 16
      %v1711 = vpop.permute.xlu0 %1710
      %1712 = vrot.lane.b32.xlu0 %v1553, 16
      %v1713 = vpop.permute.xlu0 %1712
      %vm1746 = vcmask 130048
      %v1747 = vsel %vm1746, %v1506, %v1651
      %v1748 = vsel %vm1746, %v1507, %v1653
      %v1749 = vsel %vm1746, %v1508, %v1655
      %v1750 = vsel %vm1746, %v1509, %v1657
      %v1751 = vsel %vm1746, %v1510, %v1659
      %v1752 = vsel %vm1746, %v1511, %v1661
      %v1753 = vsel %vm1746, %v1512, %v1663
      %v1754 = vsel %vm1746, %v1513, %v1665
      %v1755 = vsel %vm1746, %v1514, %v1667
      %v1756 = vsel %vm1746, %v1515, %v1669
      %v1757 = vsel %vm1746, %v1516, %v1671
      %v1758 = vsel %vm1746, %v1517, %v1673
      %v1759 = vsel %vm1746, %v1518, %v1675
      %v1760 = vsel %vm1746, %v1519, %v1677
      %v1761 = vsel %vm1746, %v1520, %v1679
      %v1762 = vsel %vm1746, %v1521, %v1681
      %v1763 = vsel %vm1746, %v1538, %v1683
      %v1764 = vsel %vm1746, %v1539, %v1685
      %v1765 = vsel %vm1746, %v1540, %v1687
      %v1766 = vsel %vm1746, %v1541, %v1689
      %v1767 = vsel %vm1746, %v1542, %v1691
      %v1768 = vsel %vm1746, %v1543, %v1693
      %v1769 = vsel %vm1746, %v1544, %v1695
      %v1770 = vsel %vm1746, %v1545, %v1697
      %v1771 = vsel %vm1746, %v1546, %v1699
      %v1772 = vsel %vm1746, %v1547, %v1701
      %v1773 = vsel %vm1746, %v1548, %v1703
      %v1774 = vsel %vm1746, %v1549, %v1705
      %v1775 = vsel %vm1746, %v1550, %v1707
      %v1776 = vsel %vm1746, %v1551, %v1709
      %v1777 = vsel %vm1746, %v1552, %v1711
      %v1778 = vsel %vm1746, %v1553, %v1713
      %vm1779 = vcmask 261120
      %1780 = vst.msk [vmem:[%s219] sm:$0xff] %vm1779, %v1747
      %1781 = vst.msk [vmem:[%s219 + $0x8] sm:$0xff] %vm1779, %v1748
      %1782 = vst.msk [vmem:[%s219 + $0x10] sm:$0xff] %vm1779, %v1749
      %1783 = vst.msk [vmem:[%s219 + $0x18] sm:$0xff] %vm1779, %v1750
      %1784 = vst.msk [vmem:[%s219 + $0x20] sm:$0xff] %vm1779, %v1751
      %1785 = vst.msk [vmem:[%s219 + $0x28] sm:$0xff] %vm1779, %v1752
      %1786 = vst.msk [vmem:[%s219 + $0x30] sm:$0xff] %vm1779, %v1753
      %1787 = vst.msk [vmem:[%s219 + $0x38] sm:$0xff] %vm1779, %v1754
      %1788 = vst.msk [vmem:[%s219 + $0x40] sm:$0xff] %vm1779, %v1755
      %1789 = vst.msk [vmem:[%s219 + $0x48] sm:$0xff] %vm1779, %v1756
      %1790 = vst.msk [vmem:[%s219 + $0x50] sm:$0xff] %vm1779, %v1757
      %1791 = vst.msk [vmem:[%s219 + $0x58] sm:$0xff] %vm1779, %v1758
      %1792 = vst.msk [vmem:[%s219 + $0x60] sm:$0xff] %vm1779, %v1759
      %1793 = vst.msk [vmem:[%s219 + $0x68] sm:$0xff] %vm1779, %v1760
      %1794 = vst.msk [vmem:[%s219 + $0x70] sm:$0xff] %vm1779, %v1761
      %1795 = vst.msk [vmem:[%s219 + $0x78] sm:$0xff] %vm1779, %v1762
      %1796 = vst.msk [vmem:[%s219 + $0x80] sm:$0xff] %vm1779, %v1763
      %1797 = vst.msk [vmem:[%s219 + $0x88] sm:$0xff] %vm1779, %v1764
      %1798 = vst.msk [vmem:[%s219 + $0x90] sm:$0xff] %vm1779, %v1765
      %1799 = vst.msk [vmem:[%s219 + $0x98] sm:$0xff] %vm1779, %v1766
      %1800 = vst.msk [vmem:[%s219 + $0xa0] sm:$0xff] %vm1779, %v1767
      %1801 = vst.msk [vmem:[%s219 + $0xa8] sm:$0xff] %vm1779, %v1768
      %1802 = vst.msk [vmem:[%s219 + $0xb0] sm:$0xff] %vm1779, %v1769
      %1803 = vst.msk [vmem:[%s219 + $0xb8] sm:$0xff] %vm1779, %v1770
      %1804 = vst.msk [vmem:[%s219 + $0xc0] sm:$0xff] %vm1779, %v1771
      %1805 = vst.msk [vmem:[%s219 + $0xc8] sm:$0xff] %vm1779, %v1772
      %1806 = vst.msk [vmem:[%s219 + $0xd0] sm:$0xff] %vm1779, %v1773
      %1807 = vst.msk [vmem:[%s219 + $0xd8] sm:$0xff] %vm1779, %v1774
      %1808 = vst.msk [vmem:[%s219 + $0xe0] sm:$0xff] %vm1779, %v1775
      %1809 = vst.msk [vmem:[%s219 + $0xe8] sm:$0xff] %vm1779, %v1776
      %1810 = vst.msk [vmem:[%s219 + $0xf0] sm:$0xff] %vm1779, %v1777
      %1811 = vst.msk [vmem:[%s219 + $0xf8] sm:$0xff] %vm1779, %v1778
      %1844 = vrot.lane.b32.xlu0 %v1570, 16
      %v1845 = vpop.permute.xlu0 %1844
      %1846 = vrot.lane.b32.xlu0 %v1571, 16
      %v1847 = vpop.permute.xlu0 %1846
      %1848 = vrot.lane.b32.xlu0 %v1572, 16
      %v1849 = vpop.permute.xlu0 %1848
      %1850 = vrot.lane.b32.xlu0 %v1573, 16
      %v1851 = vpop.permute.xlu0 %1850
      %1852 = vrot.lane.b32.xlu0 %v1574, 16
      %v1853 = vpop.permute.xlu0 %1852
      %1854 = vrot.lane.b32.xlu0 %v1575, 16
      %v1855 = vpop.permute.xlu0 %1854
      %1856 = vrot.lane.b32.xlu0 %v1576, 16
      %v1857 = vpop.permute.xlu0 %1856
      %1858 = vrot.lane.b32.xlu0 %v1577, 16
      %v1859 = vpop.permute.xlu0 %1858
      %1860 = vrot.lane.b32.xlu0 %v1578, 16
      %v1861 = vpop.permute.xlu0 %1860
      %1862 = vrot.lane.b32.xlu0 %v1579, 16
      %v1863 = vpop.permute.xlu0 %1862
      %1864 = vrot.lane.b32.xlu0 %v1580, 16
      %v1865 = vpop.permute.xlu0 %1864
      %1866 = vrot.lane.b32.xlu0 %v1581, 16
      %v1867 = vpop.permute.xlu0 %1866
      %1868 = vrot.lane.b32.xlu0 %v1582, 16
      %v1869 = vpop.permute.xlu0 %1868
      %1870 = vrot.lane.b32.xlu0 %v1583, 16
      %v1871 = vpop.permute.xlu0 %1870
      %1872 = vrot.lane.b32.xlu0 %v1584, 16
      %v1873 = vpop.permute.xlu0 %1872
      %1874 = vrot.lane.b32.xlu0 %v1585, 16
      %v1875 = vpop.permute.xlu0 %1874
      %1876 = vrot.lane.b32.xlu0 %v1602, 16
      %v1877 = vpop.permute.xlu0 %1876
      %1878 = vrot.lane.b32.xlu0 %v1603, 16
      %v1879 = vpop.permute.xlu0 %1878
      %1880 = vrot.lane.b32.xlu0 %v1604, 16
      %v1881 = vpop.permute.xlu0 %1880
      %1882 = vrot.lane.b32.xlu0 %v1605, 16
      %v1883 = vpop.permute.xlu0 %1882
      %1884 = vrot.lane.b32.xlu0 %v1606, 16
      %v1885 = vpop.permute.xlu0 %1884
      %1886 = vrot.lane.b32.xlu0 %v1607, 16
      %v1887 = vpop.permute.xlu0 %1886
      %1888 = vrot.lane.b32.xlu0 %v1608, 16
      %v1889 = vpop.permute.xlu0 %1888
      %1890 = vrot.lane.b32.xlu0 %v1609, 16
      %v1891 = vpop.permute.xlu0 %1890
      %1892 = vrot.lane.b32.xlu0 %v1610, 16
      %v1893 = vpop.permute.xlu0 %1892
      %1894 = vrot.lane.b32.xlu0 %v1611, 16
      %v1895 = vpop.permute.xlu0 %1894
      %1896 = vrot.lane.b32.xlu0 %v1612, 16
      %v1897 = vpop.permute.xlu0 %1896
      %1898 = vrot.lane.b32.xlu0 %v1613, 16
      %v1899 = vpop.permute.xlu0 %1898
      %1900 = vrot.lane.b32.xlu0 %v1614, 16
      %v1901 = vpop.permute.xlu0 %1900
      %1902 = vrot.lane.b32.xlu0 %v1615, 16
      %v1903 = vpop.permute.xlu0 %1902
      %1904 = vrot.lane.b32.xlu0 %v1616, 16
      %v1905 = vpop.permute.xlu0 %1904
      %1906 = vrot.lane.b32.xlu0 %v1617, 16
      %v1907 = vpop.permute.xlu0 %1906
      %v1940 = vsel %vm1746, %v1570, %v1845
      %v1941 = vsel %vm1746, %v1571, %v1847
      %v1942 = vsel %vm1746, %v1572, %v1849
      %v1943 = vsel %vm1746, %v1573, %v1851
      %v1944 = vsel %vm1746, %v1574, %v1853
      %v1945 = vsel %vm1746, %v1575, %v1855
      %v1946 = vsel %vm1746, %v1576, %v1857
      %v1947 = vsel %vm1746, %v1577, %v1859
      %v1948 = vsel %vm1746, %v1578, %v1861
      %v1949 = vsel %vm1746, %v1579, %v1863
      %v1950 = vsel %vm1746, %v1580, %v1865
      %v1951 = vsel %vm1746, %v1581, %v1867
      %v1952 = vsel %vm1746, %v1582, %v1869
      %v1953 = vsel %vm1746, %v1583, %v1871
      %v1954 = vsel %vm1746, %v1584, %v1873
      %v1955 = vsel %vm1746, %v1585, %v1875
      %v1956 = vsel %vm1746, %v1602, %v1877
      %v1957 = vsel %vm1746, %v1603, %v1879
      %v1958 = vsel %vm1746, %v1604, %v1881
      %v1959 = vsel %vm1746, %v1605, %v1883
      %v1960 = vsel %vm1746, %v1606, %v1885
      %v1961 = vsel %vm1746, %v1607, %v1887
      %v1962 = vsel %vm1746, %v1608, %v1889
      %v1963 = vsel %vm1746, %v1609, %v1891
      %v1964 = vsel %vm1746, %v1610, %v1893
      %v1965 = vsel %vm1746, %v1611, %v1895
      %v1966 = vsel %vm1746, %v1612, %v1897
      %v1967 = vsel %vm1746, %v1613, %v1899
      %v1968 = vsel %vm1746, %v1614, %v1901
      %v1969 = vsel %vm1746, %v1615, %v1903
      %v1970 = vsel %vm1746, %v1616, %v1905
      %v1971 = vsel %vm1746, %v1617, %v1907
      %1972 = vst.msk [vmem:[%s229] sm:$0xff] %vm1779, %v1940
      %1973 = vst.msk [vmem:[%s229 + $0x8] sm:$0xff] %vm1779, %v1941
      %1974 = vst.msk [vmem:[%s229 + $0x10] sm:$0xff] %vm1779, %v1942
      %1975 = vst.msk [vmem:[%s229 + $0x18] sm:$0xff] %vm1779, %v1943
      %1976 = vst.msk [vmem:[%s229 + $0x20] sm:$0xff] %vm1779, %v1944
      %1977 = vst.msk [vmem:[%s229 + $0x28] sm:$0xff] %vm1779, %v1945
      %1978 = vst.msk [vmem:[%s229 + $0x30] sm:$0xff] %vm1779, %v1946
      %1979 = vst.msk [vmem:[%s229 + $0x38] sm:$0xff] %vm1779, %v1947
      %1980 = vst.msk [vmem:[%s229 + $0x40] sm:$0xff] %vm1779, %v1948
      %1981 = vst.msk [vmem:[%s229 + $0x48] sm:$0xff] %vm1779, %v1949
      %1982 = vst.msk [vmem:[%s229 + $0x50] sm:$0xff] %vm1779, %v1950
      %1983 = vst.msk [vmem:[%s229 + $0x58] sm:$0xff] %vm1779, %v1951
      %1984 = vst.msk [vmem:[%s229 + $0x60] sm:$0xff] %vm1779, %v1952
      %1985 = vst.msk [vmem:[%s229 + $0x68] sm:$0xff] %vm1779, %v1953
      %1986 = vst.msk [vmem:[%s229 + $0x70] sm:$0xff] %vm1779, %v1954
      %1987 = vst.msk [vmem:[%s229 + $0x78] sm:$0xff] %vm1779, %v1955
      %1988 = vst.msk [vmem:[%s229 + $0x80] sm:$0xff] %vm1779, %v1956
      %1989 = vst.msk [vmem:[%s229 + $0x88] sm:$0xff] %vm1779, %v1957
      %1990 = vst.msk [vmem:[%s229 + $0x90] sm:$0xff] %vm1779, %v1958
      %1991 = vst.msk [vmem:[%s229 + $0x98] sm:$0xff] %vm1779, %v1959
      %1992 = vst.msk [vmem:[%s229 + $0xa0] sm:$0xff] %vm1779, %v1960
      %1993 = vst.msk [vmem:[%s229 + $0xa8] sm:$0xff] %vm1779, %v1961
      %1994 = vst.msk [vmem:[%s229 + $0xb0] sm:$0xff] %vm1779, %v1962
      %1995 = vst.msk [vmem:[%s229 + $0xb8] sm:$0xff] %vm1779, %v1963
      %1996 = vst.msk [vmem:[%s229 + $0xc0] sm:$0xff] %vm1779, %v1964
      %1997 = vst.msk [vmem:[%s229 + $0xc8] sm:$0xff] %vm1779, %v1965
      %1998 = vst.msk [vmem:[%s229 + $0xd0] sm:$0xff] %vm1779, %v1966
      %1999 = vst.msk [vmem:[%s229 + $0xd8] sm:$0xff] %vm1779, %v1967
      %2000 = vst.msk [vmem:[%s229 + $0xe0] sm:$0xff] %vm1779, %v1968
      %2001 = vst.msk [vmem:[%s229 + $0xe8] sm:$0xff] %vm1779, %v1969
      %2002 = vst.msk [vmem:[%s229 + $0xf0] sm:$0xff] %vm1779, %v1970
      %2003 = vst.msk [vmem:[%s229 + $0xf8] sm:$0xff] %vm1779, %v1971
      %s2004 = smul.u32 32, %s20
      %p2005 = scmp.lt.s32.totalorder %s19, 1
      %s2006 = scalar_select %p2005, %s19, 1
      %p2007 = scmp.lt.s32.totalorder %s2004, 31
      %s2008 = scalar_select %p2007, %s2004, 31
      %s2009 = smul.addr %s2006, 32
      %s2010 = sadd.s32 %s2008, %s2009
      %s2011 = smul.addr %s2010, 8
      %s2012 = scalar_lea.vmem %s2, %s2011
      %s2013 = smul.u32 32, %s20
      %p2014 = scmp.lt.s32.totalorder %s19, 1
      %s2015 = scalar_select %p2014, %s19, 1
      %p2016 = scmp.lt.s32.totalorder %s2013, 31
      %s2017 = scalar_select %p2016, %s2013, 31
      %s2018 = smul.addr %s2015, 32
      %s2019 = sadd.s32 %s2017, %s2018
      %s2020 = smul.addr %s2019, 8
      %s2021 = scalar_lea.vmem %s3, %s2020
      // Predicated region
      $region29: #{tpu_custom_call.1} parent=27 // pred_check
        %p2022 = pneg %p96
      $region30: #{tpu_custom_call.1} parent=27 // pred_check_branch
        %2024 = sbr.rel (%p2022) target = $region32
      $region31: #{tpu_custom_call.1} parent=27 // pred_region
        %s2025 = smul.u32 32, %s20
      $region32: #{tpu_custom_call.1} parent=27 // pred_fallthru
        _
      // Predicated region
      $region33: #{tpu_custom_call.1} parent=27 // pred_check
        %p2026 = pneg %p124
      $region34: #{tpu_custom_call.1} parent=27 // pred_check_branch
        %2028 = sbr.rel (%p2026) target = $region36
      $region35: #{tpu_custom_call.1} parent=27 // pred_region
        %s2029 = smul.u32 32, %s20
      $region36: #{tpu_custom_call.1} parent=27 // pred_fallthru
        _
    $region28: #{tpu_custom_call.1} parent=5 // pred_fallthru
      _
    %p2030 = scmp.le.s32.totalorder 2, %s10
    // Predicated region
    $region37: #{tpu_custom_call.1} parent=5 // pred_check
      %p2031 = pneg %p2030
    $region38: #{tpu_custom_call.1} parent=5 // pred_check_branch
      %2033 = sbr.rel (%p2031) target = $region40
    $region39: #{tpu_custom_call.1} parent=5 // pred_region
      %s2034 = ssub.s32 %s10, 2
      // Predicated region
      $region41: #{tpu_custom_call.1} parent=39 // pred_check
        %p2035 = pneg %p102
      $region42: #{tpu_custom_call.1} parent=39 // pred_check_branch
        %2037 = sbr.rel (%p2035) target = $region44
      $region43: #{tpu_custom_call.1} parent=39 // pred_region
        %s2038 = smul.u32 32, %s22
        %p2039 = scmp.lt.s32.totalorder %s21, 1
        %s2040 = scalar_select %p2039, %s21, 1
        %p2041 = scmp.lt.s32.totalorder %s2038, 31
        %s2042 = scalar_select %p2041, %s2038, 31
        %s2043 = smul.addr %s2040, 32
        %s2044 = sadd.s32 %s2042, %s2043
        %s2045 = smul.addr %s2044, 8
        %s2046 = scalar_lea.vmem %s2, %s2045
      $region44: #{tpu_custom_call.1} parent=39 // pred_fallthru
        _
      // Predicated region
      $region45: #{tpu_custom_call.1} parent=39 // pred_check
        %p2047 = pneg %p130
      $region46: #{tpu_custom_call.1} parent=39 // pred_check_branch
        %2049 = sbr.rel (%p2047) target = $region48
      $region47: #{tpu_custom_call.1} parent=39 // pred_region
        %s2050 = smul.u32 32, %s22
        %p2051 = scmp.lt.s32.totalorder %s21, 1
        %s2052 = scalar_select %p2051, %s21, 1
        %p2053 = scmp.lt.s32.totalorder %s2050, 31
        %s2054 = scalar_select %p2053, %s2050, 31
        %s2055 = smul.addr %s2052, 32
        %s2056 = sadd.s32 %s2054, %s2055
        %s2057 = smul.addr %s2056, 8
        %s2058 = scalar_lea.vmem %s3, %s2057
      $region48: #{tpu_custom_call.1} parent=39 // pred_fallthru
        _
    $region40: #{tpu_custom_call.1} parent=5 // pred_fallthru
      _
  $region6: #{tpu_custom_call.1} parent=0 // loop_footer
    %s14 = sadd.s32 1, %s10
  $region7: #{tpu_custom_call.1} parent=0 // loop_footer_branch
    %9 = sbr.rel target = $region3
  $region8: #{tpu_custom_call.1} parent=0 // loop_exit
    _

</llo_original>
